<compile_context>
chip_gen: v7x
topology: tpu7x:2x2x1
jax: 0.10.0
libtpu: 0.0.40
codegen_flags: <defaults>
</compile_context>

<pallas_src>
import functools
import math

import jax
import jax.numpy as jnp
from jax import lax
from jax.experimental import pallas as pl
from jax.experimental.pallas import tpu as pltpu

# Model hyperparameters (ChatbotModel defaults; small lane-dense vocab for the
# synthetic kernel).
D_MODEL = 64
NUM_HEADS = 4
D_K = D_MODEL // NUM_HEADS
VOCAB = 256
SEQ = 8
BATCH = 2


def chatbot_kernel(x_ref, wqkv_ref, bqkv_ref, wout_ref, bout_ref, out_ref, *,
                   num_heads, seq, d_model, d_k):
    """One batch element per grid step.

    x_ref:    (S, D)        activations
    wqkv_ref: (3H, D, d_k)  head-major fused Q/K/V weights [q-heads|k-heads|v-heads]
    bqkv_ref: (3H, 1, d_k)  head-major fused Q/K/V biases
    wout_ref: (H, d_k, V)   head-major (W_o @ W_head)  (fc_out fused into head)
    bout_ref: (1, V)        b_o @ W_head + b_head
    out_ref:  (S, V)        logits
    """
    groups = 3 * num_heads
    x = x_ref[...]                                                   # (S, D)

    # Fused head-major Q/K/V projection: one batched dot_general (batch = 3H).
    xg = jnp.broadcast_to(x[None, :, :], (groups, seq, d_model))     # cheap VPU copies
    qkv = lax.dot_general(xg, wqkv_ref[...],
                          (((2,), (1,)), ((0,), (0,))),
                          preferred_element_type=jnp.float32)
    qkv = qkv + bqkv_ref[...]                                        # (3H, S, d_k)

    # Leading-axis splits: whole-vreg selections, no lane-axis slicing.
    q = qkv[0:num_heads]                                             # (H, S, d_k)
    k = qkv[num_heads:2 * num_heads]                                 # (H, S, d_k)
    v = qkv[2 * num_heads:3 * num_heads]                             # (H, S, d_k)

    # Scores for all heads at once: 'hqd,hkd->hqk' (no explicit transpose).
    scores = lax.dot_general(q, k, (((2,), (2,)), ((0,), (0,))),
                             preferred_element_type=jnp.float32)
    scores = scores * (1.0 / math.sqrt(d_k))                         # (H, S, S)

    # Single batched softmax across all heads (one max/exp/sum/recip chain).
    m = jnp.max(scores, axis=-1, keepdims=True)
    p = jnp.exp(scores - m)
    attn = p * pl.reciprocal(jnp.sum(p, axis=-1, keepdims=True), approx=False)

    # Context for all heads: 'hqk,hkd->hqd'.
    ctx = lax.dot_general(attn, v, (((2,), (1,)), ((0,), (0,))),
                          preferred_element_type=jnp.float32)        # (H, S, d_k)

    # fc_out fused with response head: logits = sum_h ctx_h @ (W_o @ W_head)_h.
    logits_h = lax.dot_general(ctx, wout_ref[...], (((2,), (1,)), ((0,), (0,))),
                               preferred_element_type=jnp.float32)   # (H, S, V)
    out_ref[...] = jnp.sum(logits_h, axis=0) + bout_ref[...]         # (S, V) lane-dense


def chatbot_forward(x, params):
    """x: (B, S, D) float32 -> logits (B, S, VOCAB) float32."""
    B, S, D = x.shape
    H, dk = NUM_HEADS, D_K
    wq, bq, wk, bk, wv, bv, wo, bo, wh, bh = params
    V = wh.shape[1]

    # --- wrapper-side weight prep (head-major, algebraic fc_out fusion) ---
    def head_major_w(w):   # (D, D) -> (H, D, dk)
        return w.reshape(D, H, dk).transpose(1, 0, 2)

    def head_major_b(b):   # (1, D) -> (H, 1, dk)
        return b.reshape(1, H, dk).transpose(1, 0, 2)

    wqkv = jnp.concatenate(
        [head_major_w(wq), head_major_w(wk), head_major_w(wv)], axis=0)   # (3H, D, dk)
    bqkv = jnp.concatenate(
        [head_major_b(bq), head_major_b(bk), head_major_b(bv)], axis=0)   # (3H, 1, dk)
    wout = (wo @ wh).reshape(H, dk, V)                                    # (H, dk, V)
    bout = bo @ wh + bh                                                   # (1, V)

    kernel = functools.partial(chatbot_kernel, num_heads=H, seq=S,
                               d_model=D, d_k=dk)

    flops = 2 * (B * S * D * 3 * D            # QKV projection
                 + 2 * B * H * S * S * dk     # scores + context
                 + B * S * D * V)             # fused fc_out / response head
    bytes_accessed = 4 * (B * S * D + 3 * H * D * dk + 3 * H * dk
                          + H * dk * V + V + B * S * V)

    logits = pl.pallas_call(
        kernel,
        out_shape=jax.ShapeDtypeStruct((B, S, V), jnp.float32),
        grid=(B,),
        in_specs=[
            pl.BlockSpec((None, S, D), lambda b: (b, 0, 0)),       # x (per-batch block)
            pl.BlockSpec((3 * H, D, dk), lambda b: (0, 0, 0)),     # wqkv (grid-invariant)
            pl.BlockSpec((3 * H, 1, dk), lambda b: (0, 0, 0)),     # bqkv
            pl.BlockSpec((H, dk, V), lambda b: (0, 0, 0)),         # wout
            pl.BlockSpec((1, V), lambda b: (0, 0)),                # bout
        ],
        out_specs=pl.BlockSpec((None, S, V), lambda b: (b, 0, 0)),
        compiler_params=pltpu.CompilerParams(
            dimension_semantics=("parallel",)),                    # v7x: both TCs
        cost_estimate=pl.CostEstimate(flops=flops,
                                      transcendentals=B * H * S * S,
                                      bytes_accessed=bytes_accessed),
    )(x, wqkv, bqkv, wout, bout)
    return logits
    # TODO(synk): for a serving loop, keep the constant weight blocks resident
    # across calls (cross-call prefetch) instead of re-DMAing them every call.


def init_params(key):
    """Deterministic PyTorch-style (uniform +/- 1/sqrt(fan_in)) init.
    Linear weights stored as (in, out) (i.e. already transposed)."""
    keys = jax.random.split(key, 10)

    def linear(kw, kb, fan_in, fan_out):
        bound = 1.0 / math.sqrt(fan_in)
        w = jax.random.uniform(kw, (fan_in, fan_out), jnp.float32, -bound, bound)
        b = jax.random.uniform(kb, (1, fan_out), jnp.float32, -bound, bound)
        return w, b

    wq, bq = linear(keys[0], keys[1], D_MODEL, D_MODEL)
    wk, bk = linear(keys[2], keys[3], D_MODEL, D_MODEL)
    wv, bv = linear(keys[4], keys[5], D_MODEL, D_MODEL)
    wo, bo = linear(keys[6], keys[7], D_MODEL, D_MODEL)
    wh, bh = linear(keys[8], keys[9], D_MODEL, VOCAB)
    return (wq, bq, wk, bk, wv, bv, wo, bo, wh, bh)


def reference_forward(x, params):
    """Pure-JAX reference mirroring the PyTorch module."""
    wq, bq, wk, bk, wv, bv, wo, bo, wh, bh = params
    B, S, D = x.shape
    q = (x @ wq + bq).reshape(B, S, NUM_HEADS, D_K).transpose(0, 2, 1, 3)
    k = (x @ wk + bk).reshape(B, S, NUM_HEADS, D_K).transpose(0, 2, 1, 3)
    v = (x @ wv + bv).reshape(B, S, NUM_HEADS, D_K).transpose(0, 2, 1, 3)
    scores = jnp.einsum("bhqd,bhkd->bhqk", q, k) / math.sqrt(D_K)
    attn = jax.nn.softmax(scores, axis=-1)
    out = jnp.einsum("bhqk,bhkd->bhqd", attn, v)
    concat = out.transpose(0, 2, 1, 3).reshape(B, S, D)
    t_out = concat @ wo + bo
    return t_out @ wh + bh


if __name__ == "__main__":
    key = jax.random.PRNGKey(0)
    kx, kp = jax.random.split(key)
    x = jax.random.normal(kx, (BATCH, SEQ, D_MODEL), jnp.float32)
    params = init_params(kp)

    logits = chatbot_forward(x, params)
    logits = jax.block_until_ready(logits)

    ref = reference_forward(x, params)
    assert logits.shape == (BATCH, SEQ, VOCAB)
    assert jnp.allclose(logits, ref, atol=1e-4, rtol=1e-4)

    print("KERNEL_OK")
</pallas_src>

<mosaic_0001>
module attributes {stable_mosaic.version = 11 : i64} {
  func.func @chatbot_kernel(%arg0: i32, %arg1: memref<1x8x64xf32, #tpu.memory_space<vmem>>, %arg2: memref<12x64x16xf32, #tpu.memory_space<vmem>>, %arg3: memref<12x1x16xf32, #tpu.memory_space<vmem>>, %arg4: memref<4x16x256xf32, #tpu.memory_space<vmem>>, %arg5: memref<1x256xf32, #tpu.memory_space<vmem>>, %arg6: memref<1x8x256xf32, #tpu.memory_space<vmem>>) attributes {dimension_semantics = [#tpu.dimension_semantics<parallel>], iteration_bounds = array<i64: 2>, scalar_prefetch = 0 : i64, scratch_operands = 0 : i64, tpu.core_type = #tpu.core_type<tc>, window_params = [{transform_indices = @transform_0, window_bounds = array<i64: 1, 8, 64>}, {pipeline_mode = #tpu.pipeline_mode<synchronous>, transform_indices = @transform_1, window_bounds = array<i64: 12, 64, 16>}, {pipeline_mode = #tpu.pipeline_mode<synchronous>, transform_indices = @transform_2, window_bounds = array<i64: 12, 1, 16>}, {pipeline_mode = #tpu.pipeline_mode<synchronous>, transform_indices = @transform_3, window_bounds = array<i64: 4, 16, 256>}, {pipeline_mode = #tpu.pipeline_mode<synchronous>, transform_indices = @transform_4, window_bounds = array<i64: 1, 256>}, {transform_indices = @transform_5, window_bounds = array<i64: 1, 8, 256>}]} {
    %c0 = arith.constant 0 : index
    %c0_0 = arith.constant 0 : index
    %c0_1 = arith.constant 0 : index
    %0 = vector.load %arg1[%c0, %c0_0, %c0_1] : memref<1x8x64xf32, #tpu.memory_space<vmem>>, vector<1x8x64xf32>
    %1 = vector.shape_cast %0 : vector<1x8x64xf32> to vector<8x64xf32>
    %2 = vector.shape_cast %1 : vector<8x64xf32> to vector<1x8x64xf32>
    %3 = vector.shape_cast %2 : vector<1x8x64xf32> to vector<1x8x64xf32>
    %4 = vector.broadcast %3 : vector<1x8x64xf32> to vector<12x8x64xf32>
    %c0_2 = arith.constant 0 : index
    %c0_3 = arith.constant 0 : index
    %c0_4 = arith.constant 0 : index
    %5 = vector.load %arg2[%c0_2, %c0_3, %c0_4] : memref<12x64x16xf32, #tpu.memory_space<vmem>>, vector<12x64x16xf32>
    %cst = arith.constant dense<0.000000e+00> : vector<12x8x16xf32>
    %6 = tpu.matmul %4, %5, %cst {dimension_numbers = #tpu.dot_dimension_numbers<[2], [1], [1], [2], [0, 0, 0, 1, 1, 2], [0], [0]>} : vector<12x8x64xf32>, vector<12x64x16xf32>, vector<12x8x16xf32> -> vector<12x8x16xf32>
    %c0_5 = arith.constant 0 : index
    %c0_6 = arith.constant 0 : index
    %c0_7 = arith.constant 0 : index
    %7 = vector.load %arg3[%c0_5, %c0_6, %c0_7] : memref<12x1x16xf32, #tpu.memory_space<vmem>>, vector<12x1x16xf32>
    %8 = vector.broadcast %7 : vector<12x1x16xf32> to vector<12x8x16xf32>
    %9 = arith.addf %6, %8 : vector<12x8x16xf32>
    %10 = vector.extract_strided_slice %9 {offsets = [0, 0, 0], sizes = [4, 8, 16], strides = [1, 1, 1]} : vector<12x8x16xf32> to vector<4x8x16xf32>
    %11 = vector.extract_strided_slice %9 {offsets = [4, 0, 0], sizes = [4, 8, 16], strides = [1, 1, 1]} : vector<12x8x16xf32> to vector<4x8x16xf32>
    %12 = vector.extract_strided_slice %9 {offsets = [8, 0, 0], sizes = [4, 8, 16], strides = [1, 1, 1]} : vector<12x8x16xf32> to vector<4x8x16xf32>
    %cst_8 = arith.constant dense<0.000000e+00> : vector<4x8x8xf32>
    %13 = tpu.matmul %10, %11, %cst_8 {dimension_numbers = #tpu.dot_dimension_numbers<[2], [2], [1], [1], [0, 0, 0, 1, 1, 1], [0], [0]>} : vector<4x8x16xf32>, vector<4x8x16xf32>, vector<4x8x8xf32> -> vector<4x8x8xf32>
    %cst_9 = arith.constant 2.500000e-01 : f32
    %14 = vector.broadcast %cst_9 : f32 to vector<4x8x8xf32>
    %15 = arith.mulf %13, %14 : vector<4x8x8xf32>
    %cst_10 = arith.constant dense<0xFF800000> : vector<4x8xf32>
    %16 = vector.multi_reduction <maximumf>, %15, %cst_10 [2] : vector<4x8x8xf32> to vector<4x8xf32>
    %17 = vector.shape_cast %16 : vector<4x8xf32> to vector<4x8x1xf32>
    %18 = vector.broadcast %17 : vector<4x8x1xf32> to vector<4x8x8xf32>
    %19 = arith.subf %15, %18 : vector<4x8x8xf32>
    %20 = math.exp %19 : vector<4x8x8xf32>
    %cst_11 = arith.constant dense<0.000000e+00> : vector<4x8xf32>
    %21 = vector.multi_reduction <add>, %20, %cst_11 [2] : vector<4x8x8xf32> to vector<4x8xf32>
    %22 = vector.shape_cast %21 : vector<4x8xf32> to vector<4x8x1xf32>
    %23 = tpu.reciprocal %22 : vector<4x8x1xf32> -> vector<4x8x1xf32>
    %24 = vector.broadcast %23 : vector<4x8x1xf32> to vector<4x8x8xf32>
    %25 = arith.mulf %20, %24 : vector<4x8x8xf32>
    %cst_12 = arith.constant dense<0.000000e+00> : vector<4x8x16xf32>
    %26 = tpu.matmul %25, %12, %cst_12 {dimension_numbers = #tpu.dot_dimension_numbers<[2], [1], [1], [2], [0, 0, 0, 1, 1, 2], [0], [0]>} : vector<4x8x8xf32>, vector<4x8x16xf32>, vector<4x8x16xf32> -> vector<4x8x16xf32>
    %c0_13 = arith.constant 0 : index
    %c0_14 = arith.constant 0 : index
    %c0_15 = arith.constant 0 : index
    %27 = vector.load %arg4[%c0_13, %c0_14, %c0_15] : memref<4x16x256xf32, #tpu.memory_space<vmem>>, vector<4x16x256xf32>
    %cst_16 = arith.constant dense<0.000000e+00> : vector<4x8x256xf32>
    %28 = tpu.matmul %26, %27, %cst_16 {dimension_numbers = #tpu.dot_dimension_numbers<[2], [1], [1], [2], [0, 0, 0, 1, 1, 2], [0], [0]>} : vector<4x8x16xf32>, vector<4x16x256xf32>, vector<4x8x256xf32> -> vector<4x8x256xf32>
    %cst_17 = arith.constant dense<0.000000e+00> : vector<8x256xf32>
    %29 = vector.multi_reduction <add>, %28, %cst_17 [0] : vector<4x8x256xf32> to vector<8x256xf32>
    %c0_18 = arith.constant 0 : index
    %c0_19 = arith.constant 0 : index
    %30 = vector.load %arg5[%c0_18, %c0_19] : memref<1x256xf32, #tpu.memory_space<vmem>>, vector<1x256xf32>
    %31 = vector.broadcast %30 : vector<1x256xf32> to vector<8x256xf32>
    %32 = arith.addf %29, %31 : vector<8x256xf32>
    %c0_20 = arith.constant 0 : index
    %c0_21 = arith.constant 0 : index
    %c0_22 = arith.constant 0 : index
    %33 = vector.load %arg6[%c0_20, %c0_21, %c0_22] : memref<1x8x256xf32, #tpu.memory_space<vmem>>, vector<1x8x256xf32>
    %34 = vector.shape_cast %33 : vector<1x8x256xf32> to vector<8x256xf32>
    %35 = vector.shape_cast %32 : vector<8x256xf32> to vector<1x8x256xf32>
    tpu.vector_store %arg6[%c0_20, %c0_21, %c0_22], %35 {strides = array<i32>} : memref<1x8x256xf32, #tpu.memory_space<vmem>>, vector<1x8x256xf32>,
    return
  }
  func.func @transform_0(%arg0: i32) -> (i32, i32, i32) {
    %c0_i32 = arith.constant 0 : i32
    %c0_i32_0 = arith.constant 0 : i32
    %c0_i32_1 = arith.constant 0 : i32
    return %arg0, %c0_i32, %c0_i32_0 : i32, i32, i32
  }
  func.func @transform_1(%arg0: i32) -> (i32, i32, i32) {
    %c0_i32 = arith.constant 0 : i32
    %c0_i32_0 = arith.constant 0 : i32
    %c0_i32_1 = arith.constant 0 : i32
    %c0_i32_2 = arith.constant 0 : i32
    return %c0_i32, %c0_i32_0, %c0_i32_1 : i32, i32, i32
  }
  func.func @transform_2(%arg0: i32) -> (i32, i32, i32) {
    %c0_i32 = arith.constant 0 : i32
    %c0_i32_0 = arith.constant 0 : i32
    %c0_i32_1 = arith.constant 0 : i32
    %c0_i32_2 = arith.constant 0 : i32
    return %c0_i32, %c0_i32_0, %c0_i32_1 : i32, i32, i32
  }
  func.func @transform_3(%arg0: i32) -> (i32, i32, i32) {
    %c0_i32 = arith.constant 0 : i32
    %c0_i32_0 = arith.constant 0 : i32
    %c0_i32_1 = arith.constant 0 : i32
    %c0_i32_2 = arith.constant 0 : i32
    return %c0_i32, %c0_i32_0, %c0_i32_1 : i32, i32, i32
  }
  func.func @transform_4(%arg0: i32) -> (i32, i32) {
    %c0_i32 = arith.constant 0 : i32
    %c0_i32_0 = arith.constant 0 : i32
    %c0_i32_1 = arith.constant 0 : i32
    return %c0_i32, %c0_i32_0 : i32, i32
  }
  func.func @transform_5(%arg0: i32) -> (i32, i32, i32) {
    %c0_i32 = arith.constant 0 : i32
    %c0_i32_0 = arith.constant 0 : i32
    %c0_i32_1 = arith.constant 0 : i32
    return %arg0, %c0_i32, %c0_i32_0 : i32, i32, i32
  }
}

</mosaic_0001>

<llo_original>
// kernel: tpu_custom_call.1
$region0: #{tpu_custom_call.1}
  #allocation0 [shape = 'u32[]', space=smem, size = 0x4, offset = 0x4, fixed_abs, tag = 'smem constant byte address 0x4 - core index']
  #allocation1 [shape = 'u32[144,128]{1,0:T(1,128)}', space=vmem, size = 0x12000, scoped, tag = 'internal scratch']
  %s0 = inlined_call_operand.vmem [shape: f32[2,8,64], index: 0, kind: input, shape index: {}]
  %s1 = inlined_call_operand.vmem [shape: f32[12,64,16], index: 1, kind: input, shape index: {}]
  %s2 = inlined_call_operand.vmem [shape: f32[12,1,16], index: 2, kind: input, shape index: {}]
  %s3 = inlined_call_operand.vmem [shape: f32[4,16,256], index: 3, kind: input, shape index: {}]
  %s4 = inlined_call_operand.vmem [shape: f32[1,256], index: 4, kind: input, shape index: {}]
  %s5 = inlined_call_operand.hbm [shape: f32[2,8,256], index: 5, kind: output, shape index: {}]
  %s6 = sld [smem:[#allocation0]]
  $region53: #{tpu_custom_call.1} parent=0
    _
  %s8 = ssub.s32 1, %s6
  %s9 = scalar_select 0, %s8, %s6
  $region1: #{tpu_custom_call.1} parent=0
    #allocation2 [shape = 'u8[16384]{0}', space=vmem, size = 0x4000, scoped, tag = 'output window, operand 0']
    #allocation3 [shape = 's32[2]{0}', space=sflag, size = 0x8, scoped, tag = 'scoped memory for tpu_custom_call.1']
    %10 = vsyncpa [#allocation3], 0
    %s11 = scalar_lea.sflag [#allocation3], 1
    %12 = vsyncpa %s11, 0
    loop: start=0, step=1, limit=4
    $region2: #{tpu_custom_call.1} parent=1 // loop_pre_header
      _
    $region3: #{tpu_custom_call.1} parent=1 // loop_header
      %s14 = sphi 0, %s18
      %p15 = scmp.ge.s32.totalorder %s14, 4
      %s24 = sphi 0, %s26
      %s27 = sphi 0, %s24
      %s28 = sphi 0, %s27
      %s44 = sphi 0, %s28
      %s48 = sphi 0, %s48
      %s50 = sphi 0, %s48
      %s51 = sphi 0, %s50
      %s65 = sphi 0, %s51
      %s69 = sphi 0, %s69
      %s71 = sphi 0, %s69
      %s72 = sphi 0, %s71
      %s86 = sphi 0, %s72
      %s90 = sphi 0, %s90
      %s92 = sphi 0, %s90
      %s93 = sphi 0, %s92
      %s107 = sphi 0, %s93
      %s111 = sphi 0, %s111
      %s113 = sphi 0, %s111
      %s114 = sphi 0, %s113
      %s128 = sphi 0, %s114
      %s134 = sphi 0, %s136
      %s137 = sphi 0, %s134
      %s138 = sphi 0, %s137
      %s154 = sphi 0, %s138
    $region4: #{tpu_custom_call.1} parent=1 // loop_header_branch
      %17 = sbr.rel (%p15) target = $region8
    $region5: #{tpu_custom_call.1} parent=1 // loop_body
      %s19 = ssub.s32 %s14, 1
      %s20 = ssub.s32 %s14, 2
      %s21 = sadd.s32 %s14, 1
      %s22 = ssub.s32 %s14, %s21
      %p23 = scmp.eq.s32.totalorder %s22, 0
      %s25 = sadd.s32 %s24, 1
      %s26 = scalar_select %p23, %s24, %s25
      %p29 = pneg %p23
      %p30 = scmp.eq.s32.totalorder %s14, 1
      %p31 = por %p29, %p30
      %p32 = scmp.ne.s32.totalorder %s24, %s27
      %p33 = scmp.eq.s32.totalorder %s14, 0
      %p34 = por %p32, %p33
      %p35 = scmp.ne.s32.totalorder %s24, %s27
      %p36 = scmp.eq.s32.totalorder %s19, 1
      %p37 = por %p35, %p36
      %p38 = scmp.ne.s32.totalorder %s27, %s28
      %p39 = scmp.eq.s32.totalorder %s19, 0
      %p40 = por %p38, %p39
      %p41 = scmp.ne.s32.totalorder %s27, %s28
      %p42 = scmp.eq.s32.totalorder %s20, 1
      %p43 = por %p41, %p42
      %p45 = scmp.ne.s32.totalorder %s28, %s44
      %p46 = scmp.eq.s32.totalorder %s20, 0
      %p47 = por %p45, %p46
      %s49 = sadd.s32 %s48, 1
      %p52 = scmp.eq.s32.totalorder %s14, 1
      %p53 = scmp.ne.s32.totalorder %s48, %s50
      %p54 = scmp.eq.s32.totalorder %s14, 0
      %p55 = por %p53, %p54
      %p56 = scmp.ne.s32.totalorder %s48, %s50
      %p57 = scmp.eq.s32.totalorder %s19, 1
      %p58 = por %p56, %p57
      %p59 = scmp.ne.s32.totalorder %s50, %s51
      %p60 = scmp.eq.s32.totalorder %s19, 0
      %p61 = por %p59, %p60
      %p62 = scmp.ne.s32.totalorder %s50, %s51
      %p63 = scmp.eq.s32.totalorder %s20, 1
      %p64 = por %p62, %p63
      %p66 = scmp.ne.s32.totalorder %s51, %s65
      %p67 = scmp.eq.s32.totalorder %s20, 0
      %p68 = por %p66, %p67
      %s70 = sadd.s32 %s69, 1
      %p73 = scmp.eq.s32.totalorder %s14, 1
      %p74 = scmp.ne.s32.totalorder %s69, %s71
      %p75 = scmp.eq.s32.totalorder %s14, 0
      %p76 = por %p74, %p75
      %p77 = scmp.ne.s32.totalorder %s69, %s71
      %p78 = scmp.eq.s32.totalorder %s19, 1
      %p79 = por %p77, %p78
      %p80 = scmp.ne.s32.totalorder %s71, %s72
      %p81 = scmp.eq.s32.totalorder %s19, 0
      %p82 = por %p80, %p81
      %p83 = scmp.ne.s32.totalorder %s71, %s72
      %p84 = scmp.eq.s32.totalorder %s20, 1
      %p85 = por %p83, %p84
      %p87 = scmp.ne.s32.totalorder %s72, %s86
      %p88 = scmp.eq.s32.totalorder %s20, 0
      %p89 = por %p87, %p88
      %s91 = sadd.s32 %s90, 1
      %p94 = scmp.eq.s32.totalorder %s14, 1
      %p95 = scmp.ne.s32.totalorder %s90, %s92
      %p96 = scmp.eq.s32.totalorder %s14, 0
      %p97 = por %p95, %p96
      %p98 = scmp.ne.s32.totalorder %s90, %s92
      %p99 = scmp.eq.s32.totalorder %s19, 1
      %p100 = por %p98, %p99
      %p101 = scmp.ne.s32.totalorder %s92, %s93
      %p102 = scmp.eq.s32.totalorder %s19, 0
      %p103 = por %p101, %p102
      %p104 = scmp.ne.s32.totalorder %s92, %s93
      %p105 = scmp.eq.s32.totalorder %s20, 1
      %p106 = por %p104, %p105
      %p108 = scmp.ne.s32.totalorder %s93, %s107
      %p109 = scmp.eq.s32.totalorder %s20, 0
      %p110 = por %p108, %p109
      %s112 = sadd.s32 %s111, 1
      %p115 = scmp.eq.s32.totalorder %s14, 1
      %p116 = scmp.ne.s32.totalorder %s111, %s113
      %p117 = scmp.eq.s32.totalorder %s14, 0
      %p118 = por %p116, %p117
      %p119 = scmp.ne.s32.totalorder %s111, %s113
      %p120 = scmp.eq.s32.totalorder %s19, 1
      %p121 = por %p119, %p120
      %p122 = scmp.ne.s32.totalorder %s113, %s114
      %p123 = scmp.eq.s32.totalorder %s19, 0
      %p124 = por %p122, %p123
      %p125 = scmp.ne.s32.totalorder %s113, %s114
      %p126 = scmp.eq.s32.totalorder %s20, 1
      %p127 = por %p125, %p126
      %p129 = scmp.ne.s32.totalorder %s114, %s128
      %p130 = scmp.eq.s32.totalorder %s20, 0
      %p131 = por %p129, %p130
      %s132 = ssub.s32 %s14, %s21
      %p133 = scmp.eq.s32.totalorder %s132, 0
      %s135 = sadd.s32 %s134, 1
      %s136 = scalar_select %p133, %s134, %s135
      %p139 = pneg %p133
      %p140 = scmp.eq.s32.totalorder %s14, 1
      %p141 = por %p139, %p140
      %p142 = scmp.ne.s32.totalorder %s134, %s137
      %p143 = scmp.eq.s32.totalorder %s14, 0
      %p144 = por %p142, %p143
      %p145 = scmp.ne.s32.totalorder %s134, %s137
      %p146 = scmp.eq.s32.totalorder %s19, 1
      %p147 = por %p145, %p146
      %p148 = scmp.ne.s32.totalorder %s137, %s138
      %p149 = scmp.eq.s32.totalorder %s19, 0
      %p150 = por %p148, %p149
      %p151 = scmp.ne.s32.totalorder %s137, %s138
      %p152 = scmp.eq.s32.totalorder %s20, 1
      %p153 = por %p151, %p152
      %p155 = scmp.ne.s32.totalorder %s138, %s154
      %p156 = scmp.eq.s32.totalorder %s20, 0
      %p157 = por %p155, %p156
      %p158 = scmp.le.s32.totalorder 1, %s14
      %p159 = scmp.lt.s32.totalorder %s14, 3
      %p160 = pnand %p158, %p159
      %p161 = pneg %p160
      // Predicated region
      $region9: #{tpu_custom_call.1} parent=5 // pred_check
        _
      $region10: #{tpu_custom_call.1} parent=5 // pred_check_branch
        %163 = sbr.rel (%p160) target = $region12
      $region11: #{tpu_custom_call.1} parent=5 // pred_region
        %s164 = ssub.s32 %s14, 1
        // Predicated region
        $region13: #{tpu_custom_call.1} parent=11 // pred_check
          %p165 = pneg %p61
        $region14: #{tpu_custom_call.1} parent=11 // pred_check_branch
          %167 = sbr.rel (%p165) target = $region16
        $region15: #{tpu_custom_call.1} parent=11 // pred_region
          _
        $region16: #{tpu_custom_call.1} parent=11 // pred_fallthru
          _
        // Predicated region
        $region17: #{tpu_custom_call.1} parent=11 // pred_check
          %p168 = pneg %p82
        $region18: #{tpu_custom_call.1} parent=11 // pred_check_branch
          %170 = sbr.rel (%p168) target = $region20
        $region19: #{tpu_custom_call.1} parent=11 // pred_region
          _
        $region20: #{tpu_custom_call.1} parent=11 // pred_fallthru
          _
        // Predicated region
        $region21: #{tpu_custom_call.1} parent=11 // pred_check
          %p171 = pneg %p103
        $region22: #{tpu_custom_call.1} parent=11 // pred_check_branch
          %173 = sbr.rel (%p171) target = $region24
        $region23: #{tpu_custom_call.1} parent=11 // pred_region
          _
        $region24: #{tpu_custom_call.1} parent=11 // pred_fallthru
          _
        // Predicated region
        $region25: #{tpu_custom_call.1} parent=11 // pred_check
          %p174 = pneg %p124
        $region26: #{tpu_custom_call.1} parent=11 // pred_check_branch
          %176 = sbr.rel (%p174) target = $region28
        $region27: #{tpu_custom_call.1} parent=11 // pred_region
          _
        $region28: #{tpu_custom_call.1} parent=11 // pred_fallthru
          _
      $region12: #{tpu_custom_call.1} parent=5 // pred_fallthru
        _
      %p177 = scmp.lt.s32.totalorder %s14, 2
      // Predicated region
      $region29: #{tpu_custom_call.1} parent=5 // pred_check
        %p178 = pneg %p177
      $region30: #{tpu_custom_call.1} parent=5 // pred_check_branch
        %180 = sbr.rel (%p178) target = $region32
      $region31: #{tpu_custom_call.1} parent=5 // pred_region
        // Predicated region
        $region33: #{tpu_custom_call.1} parent=31 // pred_check
          %p181 = pneg %p34
        $region34: #{tpu_custom_call.1} parent=31 // pred_check_branch
          %183 = sbr.rel (%p181) target = $region36
        $region35: #{tpu_custom_call.1} parent=31 // pred_region
          %p184 = scmp.lt.s32.totalorder %s14, 1
          %s185 = scalar_select %p184, %s14, 1
          %s186 = smul.addr %s185, 8
          %s187 = scalar_lea.vmem %s0, %s186
        $region36: #{tpu_custom_call.1} parent=31 // pred_fallthru
          _
      $region32: #{tpu_custom_call.1} parent=5 // pred_fallthru
        _
      %p188 = scmp.le.s32.totalorder 1, %s14
      %p189 = scmp.lt.s32.totalorder %s14, 3
      %p190 = pnand %p188, %p189
      %p191 = pneg %p190
      // Predicated region
      $region37: #{tpu_custom_call.1} parent=5 // pred_check
        _
      $region38: #{tpu_custom_call.1} parent=5 // pred_check_branch
        %193 = sbr.rel (%p190) target = $region40
      $region39: #{tpu_custom_call.1} parent=5 // pred_region
        %s194 = ssub.s32 %s14, 1
        %p195 = scmp.lt.s32.totalorder %s19, 1
        %s196 = scalar_select %p195, %s19, 1
        %s197 = smul.addr %s196, 8
        %s198 = scalar_lea.vmem %s0, %s197
        %p199 = pneg %p40
        %p200 = pneg %p37
        %p201 = pneg %p61
        %p202 = pneg %p58
        %p203 = pneg %p82
        %p204 = pneg %p79
        %p205 = pneg %p103
        %p206 = pneg %p100
        %p207 = pneg %p124
        %p208 = pneg %p121
        %p209 = pneg %p150
        %p210 = pneg %p147
        %s211 = sand.u32 %s137, 1
        %s212 = scalar_lea.sflag [#allocation3], %s211
        %s213 = sand.u32 %s137, 1
        %s214 = smul.addr %s213, 16
        %s215 = scalar_lea.vmem [#allocation2], %s214
        %p216 = scmp.lt.s32.totalorder %s19, 1
        %s217 = scalar_select %p216, %s19, 1
        %s218 = smul.addr %s217, 8
        %s219 = scalar_lea.vmem %s0, %s218
        %v220 = vld [vmem:[%s219] sm:$0xff]
        %v221 = vld [vmem:[%s1] sm:$0xff]
        %v222 = vld [vmem:[%s1 + $0x8] sm:$0xff]
        %v223 = vld [vmem:[%s1 + $0x10] sm:$0xff]
        %v224 = vld [vmem:[%s1 + $0x18] sm:$0xff]
        %v225 = vld [vmem:[%s1 + $0x20] sm:$0xff]
        %v226 = vld [vmem:[%s1 + $0x28] sm:$0xff]
        %v227 = vld [vmem:[%s1 + $0x30] sm:$0xff]
        %v228 = vld [vmem:[%s1 + $0x38] sm:$0xff]
        %v229 = vld [vmem:[%s1 + $0x40] sm:$0xff]
        %v230 = vld [vmem:[%s1 + $0x48] sm:$0xff]
        %v231 = vld [vmem:[%s1 + $0x50] sm:$0xff]
        %v232 = vld [vmem:[%s1 + $0x58] sm:$0xff]
        %v233 = vld [vmem:[%s1 + $0x60] sm:$0xff]
        %v234 = vld [vmem:[%s1 + $0x68] sm:$0xff]
        %v235 = vld [vmem:[%s1 + $0x70] sm:$0xff]
        %v236 = vld [vmem:[%s1 + $0x78] sm:$0xff]
        %v237 = vld [vmem:[%s1 + $0x80] sm:$0xff]
        %v238 = vld [vmem:[%s1 + $0x88] sm:$0xff]
        %v239 = vld [vmem:[%s1 + $0x90] sm:$0xff]
        %v240 = vld [vmem:[%s1 + $0x98] sm:$0xff]
        %v241 = vld [vmem:[%s1 + $0xa0] sm:$0xff]
        %v242 = vld [vmem:[%s1 + $0xa8] sm:$0xff]
        %v243 = vld [vmem:[%s1 + $0xb0] sm:$0xff]
        %v244 = vld [vmem:[%s1 + $0xb8] sm:$0xff]
        %v245 = vld [vmem:[%s1 + $0xc0] sm:$0xff]
        %v246 = vld [vmem:[%s1 + $0xc8] sm:$0xff]
        %v247 = vld [vmem:[%s1 + $0xd0] sm:$0xff]
        %v248 = vld [vmem:[%s1 + $0xd8] sm:$0xff]
        %v249 = vld [vmem:[%s1 + $0xe0] sm:$0xff]
        %v250 = vld [vmem:[%s1 + $0xe8] sm:$0xff]
        %v251 = vld [vmem:[%s1 + $0xf0] sm:$0xff]
        %v252 = vld [vmem:[%s1 + $0xf8] sm:$0xff]
        %v253 = vld [vmem:[%s1 + $0x100] sm:$0xff]
        %v254 = vld [vmem:[%s1 + $0x108] sm:$0xff]
        %v255 = vld [vmem:[%s1 + $0x110] sm:$0xff]
        %v256 = vld [vmem:[%s1 + $0x118] sm:$0xff]
        %v257 = vld [vmem:[%s1 + $0x120] sm:$0xff]
        %v258 = vld [vmem:[%s1 + $0x128] sm:$0xff]
        %v259 = vld [vmem:[%s1 + $0x130] sm:$0xff]
        %v260 = vld [vmem:[%s1 + $0x138] sm:$0xff]
        %v261 = vld [vmem:[%s1 + $0x140] sm:$0xff]
        %v262 = vld [vmem:[%s1 + $0x148] sm:$0xff]
        %v263 = vld [vmem:[%s1 + $0x150] sm:$0xff]
        %v264 = vld [vmem:[%s1 + $0x158] sm:$0xff]
        %v265 = vld [vmem:[%s1 + $0x160] sm:$0xff]
        %v266 = vld [vmem:[%s1 + $0x168] sm:$0xff]
        %v267 = vld [vmem:[%s1 + $0x170] sm:$0xff]
        %v268 = vld [vmem:[%s1 + $0x178] sm:$0xff]
        %v269 = vld [vmem:[%s1 + $0x180] sm:$0xff]
        %v270 = vld [vmem:[%s1 + $0x188] sm:$0xff]
        %v271 = vld [vmem:[%s1 + $0x190] sm:$0xff]
        %v272 = vld [vmem:[%s1 + $0x198] sm:$0xff]
        %v273 = vld [vmem:[%s1 + $0x1a0] sm:$0xff]
        %v274 = vld [vmem:[%s1 + $0x1a8] sm:$0xff]
        %v275 = vld [vmem:[%s1 + $0x1b0] sm:$0xff]
        %v276 = vld [vmem:[%s1 + $0x1b8] sm:$0xff]
        %v277 = vld [vmem:[%s1 + $0x1c0] sm:$0xff]
        %v278 = vld [vmem:[%s1 + $0x1c8] sm:$0xff]
        %v279 = vld [vmem:[%s1 + $0x1d0] sm:$0xff]
        %v280 = vld [vmem:[%s1 + $0x1d8] sm:$0xff]
        %v281 = vld [vmem:[%s1 + $0x1e0] sm:$0xff]
        %v282 = vld [vmem:[%s1 + $0x1e8] sm:$0xff]
        %v283 = vld [vmem:[%s1 + $0x1f0] sm:$0xff]
        %v284 = vld [vmem:[%s1 + $0x1f8] sm:$0xff]
        %v285 = vld [vmem:[%s1 + $0x200] sm:$0xff]
        %v286 = vld [vmem:[%s1 + $0x208] sm:$0xff]
        %v287 = vld [vmem:[%s1 + $0x210] sm:$0xff]
        %v288 = vld [vmem:[%s1 + $0x218] sm:$0xff]
        %v289 = vld [vmem:[%s1 + $0x220] sm:$0xff]
        %v290 = vld [vmem:[%s1 + $0x228] sm:$0xff]
        %v291 = vld [vmem:[%s1 + $0x230] sm:$0xff]
        %v292 = vld [vmem:[%s1 + $0x238] sm:$0xff]
        %v293 = vld [vmem:[%s1 + $0x240] sm:$0xff]
        %v294 = vld [vmem:[%s1 + $0x248] sm:$0xff]
        %v295 = vld [vmem:[%s1 + $0x250] sm:$0xff]
        %v296 = vld [vmem:[%s1 + $0x258] sm:$0xff]
        %v297 = vld [vmem:[%s1 + $0x260] sm:$0xff]
        %v298 = vld [vmem:[%s1 + $0x268] sm:$0xff]
        %v299 = vld [vmem:[%s1 + $0x270] sm:$0xff]
        %v300 = vld [vmem:[%s1 + $0x278] sm:$0xff]
        %v301 = vld [vmem:[%s1 + $0x280] sm:$0xff]
        %v302 = vld [vmem:[%s1 + $0x288] sm:$0xff]
        %v303 = vld [vmem:[%s1 + $0x290] sm:$0xff]
        %v304 = vld [vmem:[%s1 + $0x298] sm:$0xff]
        %v305 = vld [vmem:[%s1 + $0x2a0] sm:$0xff]
        %v306 = vld [vmem:[%s1 + $0x2a8] sm:$0xff]
        %v307 = vld [vmem:[%s1 + $0x2b0] sm:$0xff]
        %v308 = vld [vmem:[%s1 + $0x2b8] sm:$0xff]
        %v309 = vld [vmem:[%s1 + $0x2c0] sm:$0xff]
        %v310 = vld [vmem:[%s1 + $0x2c8] sm:$0xff]
        %v311 = vld [vmem:[%s1 + $0x2d0] sm:$0xff]
        %v312 = vld [vmem:[%s1 + $0x2d8] sm:$0xff]
        %v313 = vld [vmem:[%s1 + $0x2e0] sm:$0xff]
        %v314 = vld [vmem:[%s1 + $0x2e8] sm:$0xff]
        %v315 = vld [vmem:[%s1 + $0x2f0] sm:$0xff]
        %v316 = vld [vmem:[%s1 + $0x2f8] sm:$0xff]
        %v317 = vld [vmem:[%s2] sm:$0x1]
        %v318 = vld [vmem:[%s2 + $0x1] sm:$0x1]
        %v319 = vld [vmem:[%s2 + $0x2] sm:$0x1]
        %v320 = vld [vmem:[%s2 + $0x3] sm:$0x1]
        %v321 = vld [vmem:[%s2 + $0x4] sm:$0x1]
        %v322 = vld [vmem:[%s2 + $0x5] sm:$0x1]
        %v323 = vld [vmem:[%s2 + $0x6] sm:$0x1]
        %v324 = vld [vmem:[%s2 + $0x7] sm:$0x1]
        %v325 = vld [vmem:[%s2 + $0x8] sm:$0x1]
        %v326 = vld [vmem:[%s2 + $0x9] sm:$0x1]
        %v327 = vld [vmem:[%s2 + $0xa] sm:$0x1]
        %v328 = vld [vmem:[%s2 + $0xb] sm:$0x1]
        %v341 = vlaneseq
        %v342 = vshrl.u32 %v341, 7
        %v343 = vsub.s32 0, %v342
        %v344 = vrot.slane %v317, %v343
        %v345 = vlaneseq
        %v346 = vshrl.u32 %v345, 7
        %v347 = vsub.s32 0, %v346
        %v348 = vrot.slane %v318, %v347
        %v349 = vlaneseq
        %v350 = vshrl.u32 %v349, 7
        %v351 = vsub.s32 0, %v350
        %v352 = vrot.slane %v319, %v351
        %v353 = vlaneseq
        %v354 = vshrl.u32 %v353, 7
        %v355 = vsub.s32 0, %v354
        %v356 = vrot.slane %v320, %v355
        %v357 = vlaneseq
        %v358 = vshrl.u32 %v357, 7
        %v359 = vsub.s32 0, %v358
        %v360 = vrot.slane %v321, %v359
        %v361 = vlaneseq
        %v362 = vshrl.u32 %v361, 7
        %v363 = vsub.s32 0, %v362
        %v364 = vrot.slane %v322, %v363
        %v365 = vlaneseq
        %v366 = vshrl.u32 %v365, 7
        %v367 = vsub.s32 0, %v366
        %v368 = vrot.slane %v323, %v367
        %v369 = vlaneseq
        %v370 = vshrl.u32 %v369, 7
        %v371 = vsub.s32 0, %v370
        %v372 = vrot.slane %v324, %v371
        %v373 = vlaneseq
        %v374 = vshrl.u32 %v373, 7
        %v375 = vsub.s32 0, %v374
        %v376 = vrot.slane %v325, %v375
        %v377 = vlaneseq
        %v378 = vshrl.u32 %v377, 7
        %v379 = vsub.s32 0, %v378
        %v380 = vrot.slane %v326, %v379
        %v381 = vlaneseq
        %v382 = vshrl.u32 %v381, 7
        %v383 = vsub.s32 0, %v382
        %v384 = vrot.slane %v327, %v383
        %v385 = vlaneseq
        %v386 = vshrl.u32 %v385, 7
        %v387 = vsub.s32 0, %v386
        %v388 = vrot.slane %v328, %v387
        %vm401 = vcmask 523264
        %v403 = vsel %vm401, %v220, 0
        %405 = vmatprep.subr.mxu0 0.0
        %406 = vmatpush1.msra.mxu0 %v221
        %407 = vmatprep.subr.mxu0 0.0
        %408 = vmatpush1.msra.mxu0 %v222
        %409 = vmatprep.subr.mxu0 0.0
        %410 = vmatpush1.msra.mxu0 %v223
        %411 = vmatprep.subr.mxu0 0.0
        %412 = vmatpush1.msra.mxu0 %v224
        %413 = vmatprep.subr.mxu0 0.0
        %414 = vmatpush1.msra.mxu0 %v225
        %415 = vmatprep.subr.mxu0 0.0
        %416 = vmatpush1.msra.mxu0 %v226
        %417 = vmatprep.subr.mxu0 0.0
        %418 = vmatpush1.msra.mxu0 %v227
        %419 = vmatprep.subr.mxu0 0.0
        %420 = vmatpush1.msra.mxu0 %v228
        %421 = vmatprep.subr.mxu0 0.0
        %422 = vmatpush1.msra.mxu0 0.0
        %423 = vmatprep.subr.mxu0 0.0
        %424 = vmatpush1.msra.mxu0 0.0
        %425 = vmatprep.subr.mxu0 0.0
        %426 = vmatpush1.msra.mxu0 0.0
        %427 = vmatprep.subr.mxu0 0.0
        %428 = vmatpush1.msra.mxu0 0.0
        %429 = vmatprep.subr.mxu0 0.0
        %430 = vmatpush1.msra.mxu0 0.0
        %431 = vmatprep.subr.mxu0 0.0
        %432 = vmatpush1.msra.mxu0 0.0
        %433 = vmatprep.subr.mxu0 0.0
        %434 = vmatpush1.msra.mxu0 0.0
        %435 = vmatprep.subr.mxu0 0.0
        %436 = vmatpush1.msra.mxu0 0.0
        %437 = vmatprep.subr.mxu0 0.0
        %438 = vmatpush1.msra.mxu0 0.0
        %439 = vmatprep.subr.mxu0 0.0
        %440 = vmatpush1.msra.mxu0 0.0
        %441 = vmatprep.subr.mxu0 0.0
        %442 = vmatpush1.msra.mxu0 0.0
        %443 = vmatprep.subr.mxu0 0.0
        %444 = vmatpush1.msra.mxu0 0.0
        %445 = vmatprep.subr.mxu0 0.0
        %446 = vmatpush1.msra.mxu0 0.0
        %447 = vmatprep.subr.mxu0 0.0
        %448 = vmatpush1.msra.mxu0 0.0
        %449 = vmatprep.subr.mxu0 0.0
        %450 = vmatpush1.msra.mxu0 0.0
        %451 = vmatprep.subr.mxu0 0.0
        %452 = vmatpush1.msra.mxu0 0.0
        %453 = vmatprep.subr.mxu0 0.0
        %454 = vmatpush1.msra.mxu0 0.0
        %455 = vmatprep.subr.mxu0 0.0
        %456 = vmatpush1.msra.mxu0 0.0
        %457 = vmatprep.subr.mxu0 0.0
        %458 = vmatpush1.msra.mxu0 0.0
        %459 = vmatprep.subr.mxu0 0.0
        %460 = vmatpush1.msra.mxu0 0.0
        %461 = vmatprep.subr.mxu0 0.0
        %462 = vmatpush1.msra.mxu0 0.0
        %463 = vmatprep.subr.mxu0 0.0
        %464 = vmatpush1.msra.mxu0 0.0
        %465 = vmatprep.subr.mxu0 0.0
        %466 = vmatpush1.msra.mxu0 0.0
        %467 = vmatprep.subr.mxu0 0.0
        %468 = vmatpush1.msra.mxu0 0.0
        %469 = vmatprep.mubr.f32.mxu0 0.0
        %470 = vmatmul.mubr.f32.gmra.mrb[0].mxu0 %v403
        %v471 = vpop.f32.mrb[0].mxu0
        %v472 = vadd.f32 %v344, %v471
        %v473 = vpop.f32.mrb[0].mxu0
        %474 = vdwg.mxu0
        %475 = vmatprep.subr.mxu0 0.0
        %476 = vmatpush1.msra.mxu0 %v229
        %477 = vmatprep.subr.mxu0 0.0
        %478 = vmatpush1.msra.mxu0 %v230
        %479 = vmatprep.subr.mxu0 0.0
        %480 = vmatpush1.msra.mxu0 %v231
        %481 = vmatprep.subr.mxu0 0.0
        %482 = vmatpush1.msra.mxu0 %v232
        %483 = vmatprep.subr.mxu0 0.0
        %484 = vmatpush1.msra.mxu0 %v233
        %485 = vmatprep.subr.mxu0 0.0
        %486 = vmatpush1.msra.mxu0 %v234
        %487 = vmatprep.subr.mxu0 0.0
        %488 = vmatpush1.msra.mxu0 %v235
        %489 = vmatprep.subr.mxu0 0.0
        %490 = vmatpush1.msra.mxu0 %v236
        %491 = vmatprep.subr.mxu0 0.0
        %492 = vmatpush1.msra.mxu0 0.0
        %493 = vmatprep.subr.mxu0 0.0
        %494 = vmatpush1.msra.mxu0 0.0
        %495 = vmatprep.subr.mxu0 0.0
        %496 = vmatpush1.msra.mxu0 0.0
        %497 = vmatprep.subr.mxu0 0.0
        %498 = vmatpush1.msra.mxu0 0.0
        %499 = vmatprep.subr.mxu0 0.0
        %500 = vmatpush1.msra.mxu0 0.0
        %501 = vmatprep.subr.mxu0 0.0
        %502 = vmatpush1.msra.mxu0 0.0
        %503 = vmatprep.subr.mxu0 0.0
        %504 = vmatpush1.msra.mxu0 0.0
        %505 = vmatprep.subr.mxu0 0.0
        %506 = vmatpush1.msra.mxu0 0.0
        %507 = vmatprep.subr.mxu0 0.0
        %508 = vmatpush1.msra.mxu0 0.0
        %509 = vmatprep.subr.mxu0 0.0
        %510 = vmatpush1.msra.mxu0 0.0
        %511 = vmatprep.subr.mxu0 0.0
        %512 = vmatpush1.msra.mxu0 0.0
        %513 = vmatprep.subr.mxu0 0.0
        %514 = vmatpush1.msra.mxu0 0.0
        %515 = vmatprep.subr.mxu0 0.0
        %516 = vmatpush1.msra.mxu0 0.0
        %517 = vmatprep.subr.mxu0 0.0
        %518 = vmatpush1.msra.mxu0 0.0
        %519 = vmatprep.subr.mxu0 0.0
        %520 = vmatpush1.msra.mxu0 0.0
        %521 = vmatprep.subr.mxu0 0.0
        %522 = vmatpush1.msra.mxu0 0.0
        %523 = vmatprep.subr.mxu0 0.0
        %524 = vmatpush1.msra.mxu0 0.0
        %525 = vmatprep.subr.mxu0 0.0
        %526 = vmatpush1.msra.mxu0 0.0
        %527 = vmatprep.subr.mxu0 0.0
        %528 = vmatpush1.msra.mxu0 0.0
        %529 = vmatprep.subr.mxu0 0.0
        %530 = vmatpush1.msra.mxu0 0.0
        %531 = vmatprep.subr.mxu0 0.0
        %532 = vmatpush1.msra.mxu0 0.0
        %533 = vmatprep.subr.mxu0 0.0
        %534 = vmatpush1.msra.mxu0 0.0
        %535 = vmatprep.subr.mxu0 0.0
        %536 = vmatpush1.msra.mxu0 0.0
        %537 = vmatprep.subr.mxu0 0.0
        %538 = vmatpush1.msra.mxu0 0.0
        %539 = vmatprep.mubr.f32.mxu0 0.0
        %540 = vmatmul.mubr.f32.gmra.mrb[0].mxu0 %v403
        %v541 = vpop.f32.mrb[0].mxu0
        %v542 = vadd.f32 %v348, %v541
        %v543 = vpop.f32.mrb[0].mxu0
        %544 = vdwg.mxu0
        %545 = vmatprep.subr.mxu0 0.0
        %546 = vmatpush1.msra.mxu0 %v237
        %547 = vmatprep.subr.mxu0 0.0
        %548 = vmatpush1.msra.mxu0 %v238
        %549 = vmatprep.subr.mxu0 0.0
        %550 = vmatpush1.msra.mxu0 %v239
        %551 = vmatprep.subr.mxu0 0.0
        %552 = vmatpush1.msra.mxu0 %v240
        %553 = vmatprep.subr.mxu0 0.0
        %554 = vmatpush1.msra.mxu0 %v241
        %555 = vmatprep.subr.mxu0 0.0
        %556 = vmatpush1.msra.mxu0 %v242
        %557 = vmatprep.subr.mxu0 0.0
        %558 = vmatpush1.msra.mxu0 %v243
        %559 = vmatprep.subr.mxu0 0.0
        %560 = vmatpush1.msra.mxu0 %v244
        %561 = vmatprep.subr.mxu0 0.0
        %562 = vmatpush1.msra.mxu0 0.0
        %563 = vmatprep.subr.mxu0 0.0
        %564 = vmatpush1.msra.mxu0 0.0
        %565 = vmatprep.subr.mxu0 0.0
        %566 = vmatpush1.msra.mxu0 0.0
        %567 = vmatprep.subr.mxu0 0.0
        %568 = vmatpush1.msra.mxu0 0.0
        %569 = vmatprep.subr.mxu0 0.0
        %570 = vmatpush1.msra.mxu0 0.0
        %571 = vmatprep.subr.mxu0 0.0
        %572 = vmatpush1.msra.mxu0 0.0
        %573 = vmatprep.subr.mxu0 0.0
        %574 = vmatpush1.msra.mxu0 0.0
        %575 = vmatprep.subr.mxu0 0.0
        %576 = vmatpush1.msra.mxu0 0.0
        %577 = vmatprep.subr.mxu0 0.0
        %578 = vmatpush1.msra.mxu0 0.0
        %579 = vmatprep.subr.mxu0 0.0
        %580 = vmatpush1.msra.mxu0 0.0
        %581 = vmatprep.subr.mxu0 0.0
        %582 = vmatpush1.msra.mxu0 0.0
        %583 = vmatprep.subr.mxu0 0.0
        %584 = vmatpush1.msra.mxu0 0.0
        %585 = vmatprep.subr.mxu0 0.0
        %586 = vmatpush1.msra.mxu0 0.0
        %587 = vmatprep.subr.mxu0 0.0
        %588 = vmatpush1.msra.mxu0 0.0
        %589 = vmatprep.subr.mxu0 0.0
        %590 = vmatpush1.msra.mxu0 0.0
        %591 = vmatprep.subr.mxu0 0.0
        %592 = vmatpush1.msra.mxu0 0.0
        %593 = vmatprep.subr.mxu0 0.0
        %594 = vmatpush1.msra.mxu0 0.0
        %595 = vmatprep.subr.mxu0 0.0
        %596 = vmatpush1.msra.mxu0 0.0
        %597 = vmatprep.subr.mxu0 0.0
        %598 = vmatpush1.msra.mxu0 0.0
        %599 = vmatprep.subr.mxu0 0.0
        %600 = vmatpush1.msra.mxu0 0.0
        %601 = vmatprep.subr.mxu0 0.0
        %602 = vmatpush1.msra.mxu0 0.0
        %603 = vmatprep.subr.mxu0 0.0
        %604 = vmatpush1.msra.mxu0 0.0
        %605 = vmatprep.subr.mxu0 0.0
        %606 = vmatpush1.msra.mxu0 0.0
        %607 = vmatprep.subr.mxu0 0.0
        %608 = vmatpush1.msra.mxu0 0.0
        %609 = vmatprep.mubr.f32.mxu0 0.0
        %610 = vmatmul.mubr.f32.gmra.mrb[0].mxu0 %v403
        %v611 = vpop.f32.mrb[0].mxu0
        %v612 = vadd.f32 %v352, %v611
        %v613 = vpop.f32.mrb[0].mxu0
        %614 = vdwg.mxu0
        %615 = vmatprep.subr.mxu0 0.0
        %616 = vmatpush1.msra.mxu0 %v245
        %617 = vmatprep.subr.mxu0 0.0
        %618 = vmatpush1.msra.mxu0 %v246
        %619 = vmatprep.subr.mxu0 0.0
        %620 = vmatpush1.msra.mxu0 %v247
        %621 = vmatprep.subr.mxu0 0.0
        %622 = vmatpush1.msra.mxu0 %v248
        %623 = vmatprep.subr.mxu0 0.0
        %624 = vmatpush1.msra.mxu0 %v249
        %625 = vmatprep.subr.mxu0 0.0
        %626 = vmatpush1.msra.mxu0 %v250
        %627 = vmatprep.subr.mxu0 0.0
        %628 = vmatpush1.msra.mxu0 %v251
        %629 = vmatprep.subr.mxu0 0.0
        %630 = vmatpush1.msra.mxu0 %v252
        %631 = vmatprep.subr.mxu0 0.0
        %632 = vmatpush1.msra.mxu0 0.0
        %633 = vmatprep.subr.mxu0 0.0
        %634 = vmatpush1.msra.mxu0 0.0
        %635 = vmatprep.subr.mxu0 0.0
        %636 = vmatpush1.msra.mxu0 0.0
        %637 = vmatprep.subr.mxu0 0.0
        %638 = vmatpush1.msra.mxu0 0.0
        %639 = vmatprep.subr.mxu0 0.0
        %640 = vmatpush1.msra.mxu0 0.0
        %641 = vmatprep.subr.mxu0 0.0
        %642 = vmatpush1.msra.mxu0 0.0
        %643 = vmatprep.subr.mxu0 0.0
        %644 = vmatpush1.msra.mxu0 0.0
        %645 = vmatprep.subr.mxu0 0.0
        %646 = vmatpush1.msra.mxu0 0.0
        %647 = vmatprep.subr.mxu0 0.0
        %648 = vmatpush1.msra.mxu0 0.0
        %649 = vmatprep.subr.mxu0 0.0
        %650 = vmatpush1.msra.mxu0 0.0
        %651 = vmatprep.subr.mxu0 0.0
        %652 = vmatpush1.msra.mxu0 0.0
        %653 = vmatprep.subr.mxu0 0.0
        %654 = vmatpush1.msra.mxu0 0.0
        %655 = vmatprep.subr.mxu0 0.0
        %656 = vmatpush1.msra.mxu0 0.0
        %657 = vmatprep.subr.mxu0 0.0
        %658 = vmatpush1.msra.mxu0 0.0
        %659 = vmatprep.subr.mxu0 0.0
        %660 = vmatpush1.msra.mxu0 0.0
        %661 = vmatprep.subr.mxu0 0.0
        %662 = vmatpush1.msra.mxu0 0.0
        %663 = vmatprep.subr.mxu0 0.0
        %664 = vmatpush1.msra.mxu0 0.0
        %665 = vmatprep.subr.mxu0 0.0
        %666 = vmatpush1.msra.mxu0 0.0
        %667 = vmatprep.subr.mxu0 0.0
        %668 = vmatpush1.msra.mxu0 0.0
        %669 = vmatprep.subr.mxu0 0.0
        %670 = vmatpush1.msra.mxu0 0.0
        %671 = vmatprep.subr.mxu0 0.0
        %672 = vmatpush1.msra.mxu0 0.0
        %673 = vmatprep.subr.mxu0 0.0
        %674 = vmatpush1.msra.mxu0 0.0
        %675 = vmatprep.subr.mxu0 0.0
        %676 = vmatpush1.msra.mxu0 0.0
        %677 = vmatprep.subr.mxu0 0.0
        %678 = vmatpush1.msra.mxu0 0.0
        %679 = vmatprep.mubr.f32.mxu0 0.0
        %680 = vmatmul.mubr.f32.gmra.mrb[0].mxu0 %v403
        %v681 = vpop.f32.mrb[0].mxu0
        %v682 = vadd.f32 %v356, %v681
        %v683 = vpop.f32.mrb[0].mxu0
        %684 = vdwg.mxu0
        %685 = vmatprep.subr.mxu0 0.0
        %686 = vmatpush1.msra.mxu0 %v253
        %687 = vmatprep.subr.mxu0 0.0
        %688 = vmatpush1.msra.mxu0 %v254
        %689 = vmatprep.subr.mxu0 0.0
        %690 = vmatpush1.msra.mxu0 %v255
        %691 = vmatprep.subr.mxu0 0.0
        %692 = vmatpush1.msra.mxu0 %v256
        %693 = vmatprep.subr.mxu0 0.0
        %694 = vmatpush1.msra.mxu0 %v257
        %695 = vmatprep.subr.mxu0 0.0
        %696 = vmatpush1.msra.mxu0 %v258
        %697 = vmatprep.subr.mxu0 0.0
        %698 = vmatpush1.msra.mxu0 %v259
        %699 = vmatprep.subr.mxu0 0.0
        %700 = vmatpush1.msra.mxu0 %v260
        %701 = vmatprep.subr.mxu0 0.0
        %702 = vmatpush1.msra.mxu0 0.0
        %703 = vmatprep.subr.mxu0 0.0
        %704 = vmatpush1.msra.mxu0 0.0
        %705 = vmatprep.subr.mxu0 0.0
        %706 = vmatpush1.msra.mxu0 0.0
        %707 = vmatprep.subr.mxu0 0.0
        %708 = vmatpush1.msra.mxu0 0.0
        %709 = vmatprep.subr.mxu0 0.0
        %710 = vmatpush1.msra.mxu0 0.0
        %711 = vmatprep.subr.mxu0 0.0
        %712 = vmatpush1.msra.mxu0 0.0
        %713 = vmatprep.subr.mxu0 0.0
        %714 = vmatpush1.msra.mxu0 0.0
        %715 = vmatprep.subr.mxu0 0.0
        %716 = vmatpush1.msra.mxu0 0.0
        %717 = vmatprep.subr.mxu0 0.0
        %718 = vmatpush1.msra.mxu0 0.0
        %719 = vmatprep.subr.mxu0 0.0
        %720 = vmatpush1.msra.mxu0 0.0
        %721 = vmatprep.subr.mxu0 0.0
        %722 = vmatpush1.msra.mxu0 0.0
        %723 = vmatprep.subr.mxu0 0.0
        %724 = vmatpush1.msra.mxu0 0.0
        %725 = vmatprep.subr.mxu0 0.0
        %726 = vmatpush1.msra.mxu0 0.0
        %727 = vmatprep.subr.mxu0 0.0
        %728 = vmatpush1.msra.mxu0 0.0
        %729 = vmatprep.subr.mxu0 0.0
        %730 = vmatpush1.msra.mxu0 0.0
        %731 = vmatprep.subr.mxu0 0.0
        %732 = vmatpush1.msra.mxu0 0.0
        %733 = vmatprep.subr.mxu0 0.0
        %734 = vmatpush1.msra.mxu0 0.0
        %735 = vmatprep.subr.mxu0 0.0
        %736 = vmatpush1.msra.mxu0 0.0
        %737 = vmatprep.subr.mxu0 0.0
        %738 = vmatpush1.msra.mxu0 0.0
        %739 = vmatprep.subr.mxu0 0.0
        %740 = vmatpush1.msra.mxu0 0.0
        %741 = vmatprep.subr.mxu0 0.0
        %742 = vmatpush1.msra.mxu0 0.0
        %743 = vmatprep.subr.mxu0 0.0
        %744 = vmatpush1.msra.mxu0 0.0
        %745 = vmatprep.subr.mxu0 0.0
        %746 = vmatpush1.msra.mxu0 0.0
        %747 = vmatprep.subr.mxu0 0.0
        %748 = vmatpush1.msra.mxu0 0.0
        %749 = vmatprep.mubr.f32.mxu0 0.0
        %750 = vmatmul.mubr.f32.gmra.mrb[0].mxu0 %v403
        %v751 = vpop.f32.mrb[0].mxu0
        %v752 = vadd.f32 %v360, %v751
        %v753 = vpop.f32.mrb[0].mxu0
        %754 = vdwg.mxu0
        %755 = vmatprep.subr.mxu0 0.0
        %756 = vmatpush1.msra.mxu0 %v261
        %757 = vmatprep.subr.mxu0 0.0
        %758 = vmatpush1.msra.mxu0 %v262
        %759 = vmatprep.subr.mxu0 0.0
        %760 = vmatpush1.msra.mxu0 %v263
        %761 = vmatprep.subr.mxu0 0.0
        %762 = vmatpush1.msra.mxu0 %v264
        %763 = vmatprep.subr.mxu0 0.0
        %764 = vmatpush1.msra.mxu0 %v265
        %765 = vmatprep.subr.mxu0 0.0
        %766 = vmatpush1.msra.mxu0 %v266
        %767 = vmatprep.subr.mxu0 0.0
        %768 = vmatpush1.msra.mxu0 %v267
        %769 = vmatprep.subr.mxu0 0.0
        %770 = vmatpush1.msra.mxu0 %v268
        %771 = vmatprep.subr.mxu0 0.0
        %772 = vmatpush1.msra.mxu0 0.0
        %773 = vmatprep.subr.mxu0 0.0
        %774 = vmatpush1.msra.mxu0 0.0
        %775 = vmatprep.subr.mxu0 0.0
        %776 = vmatpush1.msra.mxu0 0.0
        %777 = vmatprep.subr.mxu0 0.0
        %778 = vmatpush1.msra.mxu0 0.0
        %779 = vmatprep.subr.mxu0 0.0
        %780 = vmatpush1.msra.mxu0 0.0
        %781 = vmatprep.subr.mxu0 0.0
        %782 = vmatpush1.msra.mxu0 0.0
        %783 = vmatprep.subr.mxu0 0.0
        %784 = vmatpush1.msra.mxu0 0.0
        %785 = vmatprep.subr.mxu0 0.0
        %786 = vmatpush1.msra.mxu0 0.0
        %787 = vmatprep.subr.mxu0 0.0
        %788 = vmatpush1.msra.mxu0 0.0
        %789 = vmatprep.subr.mxu0 0.0
        %790 = vmatpush1.msra.mxu0 0.0
        %791 = vmatprep.subr.mxu0 0.0
        %792 = vmatpush1.msra.mxu0 0.0
        %793 = vmatprep.subr.mxu0 0.0
        %794 = vmatpush1.msra.mxu0 0.0
        %795 = vmatprep.subr.mxu0 0.0
        %796 = vmatpush1.msra.mxu0 0.0
        %797 = vmatprep.subr.mxu0 0.0
        %798 = vmatpush1.msra.mxu0 0.0
        %799 = vmatprep.subr.mxu0 0.0
        %800 = vmatpush1.msra.mxu0 0.0
        %801 = vmatprep.subr.mxu0 0.0
        %802 = vmatpush1.msra.mxu0 0.0
        %803 = vmatprep.subr.mxu0 0.0
        %804 = vmatpush1.msra.mxu0 0.0
        %805 = vmatprep.subr.mxu0 0.0
        %806 = vmatpush1.msra.mxu0 0.0
        %807 = vmatprep.subr.mxu0 0.0
        %808 = vmatpush1.msra.mxu0 0.0
        %809 = vmatprep.subr.mxu0 0.0
        %810 = vmatpush1.msra.mxu0 0.0
        %811 = vmatprep.subr.mxu0 0.0
        %812 = vmatpush1.msra.mxu0 0.0
        %813 = vmatprep.subr.mxu0 0.0
        %814 = vmatpush1.msra.mxu0 0.0
        %815 = vmatprep.subr.mxu0 0.0
        %816 = vmatpush1.msra.mxu0 0.0
        %817 = vmatprep.subr.mxu0 0.0
        %818 = vmatpush1.msra.mxu0 0.0
        %819 = vmatprep.mubr.f32.mxu0 0.0
        %820 = vmatmul.mubr.f32.gmra.mrb[0].mxu0 %v403
        %v821 = vpop.f32.mrb[0].mxu0
        %v822 = vadd.f32 %v364, %v821
        %v823 = vpop.f32.mrb[0].mxu0
        %824 = vdwg.mxu0
        %825 = vmatprep.subr.mxu0 0.0
        %826 = vmatpush1.msra.mxu0 %v269
        %827 = vmatprep.subr.mxu0 0.0
        %828 = vmatpush1.msra.mxu0 %v270
        %829 = vmatprep.subr.mxu0 0.0
        %830 = vmatpush1.msra.mxu0 %v271
        %831 = vmatprep.subr.mxu0 0.0
        %832 = vmatpush1.msra.mxu0 %v272
        %833 = vmatprep.subr.mxu0 0.0
        %834 = vmatpush1.msra.mxu0 %v273
        %835 = vmatprep.subr.mxu0 0.0
        %836 = vmatpush1.msra.mxu0 %v274
        %837 = vmatprep.subr.mxu0 0.0
        %838 = vmatpush1.msra.mxu0 %v275
        %839 = vmatprep.subr.mxu0 0.0
        %840 = vmatpush1.msra.mxu0 %v276
        %841 = vmatprep.subr.mxu0 0.0
        %842 = vmatpush1.msra.mxu0 0.0
        %843 = vmatprep.subr.mxu0 0.0
        %844 = vmatpush1.msra.mxu0 0.0
        %845 = vmatprep.subr.mxu0 0.0
        %846 = vmatpush1.msra.mxu0 0.0
        %847 = vmatprep.subr.mxu0 0.0
        %848 = vmatpush1.msra.mxu0 0.0
        %849 = vmatprep.subr.mxu0 0.0
        %850 = vmatpush1.msra.mxu0 0.0
        %851 = vmatprep.subr.mxu0 0.0
        %852 = vmatpush1.msra.mxu0 0.0
        %853 = vmatprep.subr.mxu0 0.0
        %854 = vmatpush1.msra.mxu0 0.0
        %855 = vmatprep.subr.mxu0 0.0
        %856 = vmatpush1.msra.mxu0 0.0
        %857 = vmatprep.subr.mxu0 0.0
        %858 = vmatpush1.msra.mxu0 0.0
        %859 = vmatprep.subr.mxu0 0.0
        %860 = vmatpush1.msra.mxu0 0.0
        %861 = vmatprep.subr.mxu0 0.0
        %862 = vmatpush1.msra.mxu0 0.0
        %863 = vmatprep.subr.mxu0 0.0
        %864 = vmatpush1.msra.mxu0 0.0
        %865 = vmatprep.subr.mxu0 0.0
        %866 = vmatpush1.msra.mxu0 0.0
        %867 = vmatprep.subr.mxu0 0.0
        %868 = vmatpush1.msra.mxu0 0.0
        %869 = vmatprep.subr.mxu0 0.0
        %870 = vmatpush1.msra.mxu0 0.0
        %871 = vmatprep.subr.mxu0 0.0
        %872 = vmatpush1.msra.mxu0 0.0
        %873 = vmatprep.subr.mxu0 0.0
        %874 = vmatpush1.msra.mxu0 0.0
        %875 = vmatprep.subr.mxu0 0.0
        %876 = vmatpush1.msra.mxu0 0.0
        %877 = vmatprep.subr.mxu0 0.0
        %878 = vmatpush1.msra.mxu0 0.0
        %879 = vmatprep.subr.mxu0 0.0
        %880 = vmatpush1.msra.mxu0 0.0
        %881 = vmatprep.subr.mxu0 0.0
        %882 = vmatpush1.msra.mxu0 0.0
        %883 = vmatprep.subr.mxu0 0.0
        %884 = vmatpush1.msra.mxu0 0.0
        %885 = vmatprep.subr.mxu0 0.0
        %886 = vmatpush1.msra.mxu0 0.0
        %887 = vmatprep.subr.mxu0 0.0
        %888 = vmatpush1.msra.mxu0 0.0
        %889 = vmatprep.mubr.f32.mxu0 0.0
        %890 = vmatmul.mubr.f32.gmra.mrb[0].mxu0 %v403
        %v891 = vpop.f32.mrb[0].mxu0
        %v892 = vadd.f32 %v368, %v891
        %v893 = vpop.f32.mrb[0].mxu0
        %894 = vdwg.mxu0
        %895 = vmatprep.subr.mxu0 0.0
        %896 = vmatpush1.msra.mxu0 %v277
        %897 = vmatprep.subr.mxu0 0.0
        %898 = vmatpush1.msra.mxu0 %v278
        %899 = vmatprep.subr.mxu0 0.0
        %900 = vmatpush1.msra.mxu0 %v279
        %901 = vmatprep.subr.mxu0 0.0
        %902 = vmatpush1.msra.mxu0 %v280
        %903 = vmatprep.subr.mxu0 0.0
        %904 = vmatpush1.msra.mxu0 %v281
        %905 = vmatprep.subr.mxu0 0.0
        %906 = vmatpush1.msra.mxu0 %v282
        %907 = vmatprep.subr.mxu0 0.0
        %908 = vmatpush1.msra.mxu0 %v283
        %909 = vmatprep.subr.mxu0 0.0
        %910 = vmatpush1.msra.mxu0 %v284
        %911 = vmatprep.subr.mxu0 0.0
        %912 = vmatpush1.msra.mxu0 0.0
        %913 = vmatprep.subr.mxu0 0.0
        %914 = vmatpush1.msra.mxu0 0.0
        %915 = vmatprep.subr.mxu0 0.0
        %916 = vmatpush1.msra.mxu0 0.0
        %917 = vmatprep.subr.mxu0 0.0
        %918 = vmatpush1.msra.mxu0 0.0
        %919 = vmatprep.subr.mxu0 0.0
        %920 = vmatpush1.msra.mxu0 0.0
        %921 = vmatprep.subr.mxu0 0.0
        %922 = vmatpush1.msra.mxu0 0.0
        %923 = vmatprep.subr.mxu0 0.0
        %924 = vmatpush1.msra.mxu0 0.0
        %925 = vmatprep.subr.mxu0 0.0
        %926 = vmatpush1.msra.mxu0 0.0
        %927 = vmatprep.subr.mxu0 0.0
        %928 = vmatpush1.msra.mxu0 0.0
        %929 = vmatprep.subr.mxu0 0.0
        %930 = vmatpush1.msra.mxu0 0.0
        %931 = vmatprep.subr.mxu0 0.0
        %932 = vmatpush1.msra.mxu0 0.0
        %933 = vmatprep.subr.mxu0 0.0
        %934 = vmatpush1.msra.mxu0 0.0
        %935 = vmatprep.subr.mxu0 0.0
        %936 = vmatpush1.msra.mxu0 0.0
        %937 = vmatprep.subr.mxu0 0.0
        %938 = vmatpush1.msra.mxu0 0.0
        %939 = vmatprep.subr.mxu0 0.0
        %940 = vmatpush1.msra.mxu0 0.0
        %941 = vmatprep.subr.mxu0 0.0
        %942 = vmatpush1.msra.mxu0 0.0
        %943 = vmatprep.subr.mxu0 0.0
        %944 = vmatpush1.msra.mxu0 0.0
        %945 = vmatprep.subr.mxu0 0.0
        %946 = vmatpush1.msra.mxu0 0.0
        %947 = vmatprep.subr.mxu0 0.0
        %948 = vmatpush1.msra.mxu0 0.0
        %949 = vmatprep.subr.mxu0 0.0
        %950 = vmatpush1.msra.mxu0 0.0
        %951 = vmatprep.subr.mxu0 0.0
        %952 = vmatpush1.msra.mxu0 0.0
        %953 = vmatprep.subr.mxu0 0.0
        %954 = vmatpush1.msra.mxu0 0.0
        %955 = vmatprep.subr.mxu0 0.0
        %956 = vmatpush1.msra.mxu0 0.0
        %957 = vmatprep.subr.mxu0 0.0
        %958 = vmatpush1.msra.mxu0 0.0
        %959 = vmatprep.mubr.f32.mxu0 0.0
        %960 = vmatmul.mubr.f32.gmra.mrb[0].mxu0 %v403
        %v961 = vpop.f32.mrb[0].mxu0
        %v962 = vadd.f32 %v372, %v961
        %v963 = vpop.f32.mrb[0].mxu0
        %964 = vdwg.mxu0
        %965 = vmatprep.subr.mxu0 0.0
        %966 = vmatpush1.msra.mxu0 %v285
        %967 = vmatprep.subr.mxu0 0.0
        %968 = vmatpush1.msra.mxu0 %v286
        %969 = vmatprep.subr.mxu0 0.0
        %970 = vmatpush1.msra.mxu0 %v287
        %971 = vmatprep.subr.mxu0 0.0
        %972 = vmatpush1.msra.mxu0 %v288
        %973 = vmatprep.subr.mxu0 0.0
        %974 = vmatpush1.msra.mxu0 %v289
        %975 = vmatprep.subr.mxu0 0.0
        %976 = vmatpush1.msra.mxu0 %v290
        %977 = vmatprep.subr.mxu0 0.0
        %978 = vmatpush1.msra.mxu0 %v291
        %979 = vmatprep.subr.mxu0 0.0
        %980 = vmatpush1.msra.mxu0 %v292
        %981 = vmatprep.subr.mxu0 0.0
        %982 = vmatpush1.msra.mxu0 0.0
        %983 = vmatprep.subr.mxu0 0.0
        %984 = vmatpush1.msra.mxu0 0.0
        %985 = vmatprep.subr.mxu0 0.0
        %986 = vmatpush1.msra.mxu0 0.0
        %987 = vmatprep.subr.mxu0 0.0
        %988 = vmatpush1.msra.mxu0 0.0
        %989 = vmatprep.subr.mxu0 0.0
        %990 = vmatpush1.msra.mxu0 0.0
        %991 = vmatprep.subr.mxu0 0.0
        %992 = vmatpush1.msra.mxu0 0.0
        %993 = vmatprep.subr.mxu0 0.0
        %994 = vmatpush1.msra.mxu0 0.0
        %995 = vmatprep.subr.mxu0 0.0
        %996 = vmatpush1.msra.mxu0 0.0
        %997 = vmatprep.subr.mxu0 0.0
        %998 = vmatpush1.msra.mxu0 0.0
        %999 = vmatprep.subr.mxu0 0.0
        %1000 = vmatpush1.msra.mxu0 0.0
        %1001 = vmatprep.subr.mxu0 0.0
        %1002 = vmatpush1.msra.mxu0 0.0
        %1003 = vmatprep.subr.mxu0 0.0
        %1004 = vmatpush1.msra.mxu0 0.0
        %1005 = vmatprep.subr.mxu0 0.0
        %1006 = vmatpush1.msra.mxu0 0.0
        %1007 = vmatprep.subr.mxu0 0.0
        %1008 = vmatpush1.msra.mxu0 0.0
        %1009 = vmatprep.subr.mxu0 0.0
        %1010 = vmatpush1.msra.mxu0 0.0
        %1011 = vmatprep.subr.mxu0 0.0
        %1012 = vmatpush1.msra.mxu0 0.0
        %1013 = vmatprep.subr.mxu0 0.0
        %1014 = vmatpush1.msra.mxu0 0.0
        %1015 = vmatprep.subr.mxu0 0.0
        %1016 = vmatpush1.msra.mxu0 0.0
        %1017 = vmatprep.subr.mxu0 0.0
        %1018 = vmatpush1.msra.mxu0 0.0
        %1019 = vmatprep.subr.mxu0 0.0
        %1020 = vmatpush1.msra.mxu0 0.0
        %1021 = vmatprep.subr.mxu0 0.0
        %1022 = vmatpush1.msra.mxu0 0.0
        %1023 = vmatprep.subr.mxu0 0.0
        %1024 = vmatpush1.msra.mxu0 0.0
        %1025 = vmatprep.subr.mxu0 0.0
        %1026 = vmatpush1.msra.mxu0 0.0
        %1027 = vmatprep.subr.mxu0 0.0
        %1028 = vmatpush1.msra.mxu0 0.0
        %1029 = vmatprep.mubr.f32.mxu0 0.0
        %1030 = vmatmul.mubr.f32.gmra.mrb[0].mxu0 %v403
        %v1031 = vpop.f32.mrb[0].mxu0
        %v1032 = vadd.f32 %v376, %v1031
        %v1033 = vpop.f32.mrb[0].mxu0
        %1034 = vdwg.mxu0
        %1035 = vmatprep.subr.mxu0 0.0
        %1036 = vmatpush1.msra.mxu0 %v293
        %1037 = vmatprep.subr.mxu0 0.0
        %1038 = vmatpush1.msra.mxu0 %v294
        %1039 = vmatprep.subr.mxu0 0.0
        %1040 = vmatpush1.msra.mxu0 %v295
        %1041 = vmatprep.subr.mxu0 0.0
        %1042 = vmatpush1.msra.mxu0 %v296
        %1043 = vmatprep.subr.mxu0 0.0
        %1044 = vmatpush1.msra.mxu0 %v297
        %1045 = vmatprep.subr.mxu0 0.0
        %1046 = vmatpush1.msra.mxu0 %v298
        %1047 = vmatprep.subr.mxu0 0.0
        %1048 = vmatpush1.msra.mxu0 %v299
        %1049 = vmatprep.subr.mxu0 0.0
        %1050 = vmatpush1.msra.mxu0 %v300
        %1051 = vmatprep.subr.mxu0 0.0
        %1052 = vmatpush1.msra.mxu0 0.0
        %1053 = vmatprep.subr.mxu0 0.0
        %1054 = vmatpush1.msra.mxu0 0.0
        %1055 = vmatprep.subr.mxu0 0.0
        %1056 = vmatpush1.msra.mxu0 0.0
        %1057 = vmatprep.subr.mxu0 0.0
        %1058 = vmatpush1.msra.mxu0 0.0
        %1059 = vmatprep.subr.mxu0 0.0
        %1060 = vmatpush1.msra.mxu0 0.0
        %1061 = vmatprep.subr.mxu0 0.0
        %1062 = vmatpush1.msra.mxu0 0.0
        %1063 = vmatprep.subr.mxu0 0.0
        %1064 = vmatpush1.msra.mxu0 0.0
        %1065 = vmatprep.subr.mxu0 0.0
        %1066 = vmatpush1.msra.mxu0 0.0
        %1067 = vmatprep.subr.mxu0 0.0
        %1068 = vmatpush1.msra.mxu0 0.0
        %1069 = vmatprep.subr.mxu0 0.0
        %1070 = vmatpush1.msra.mxu0 0.0
        %1071 = vmatprep.subr.mxu0 0.0
        %1072 = vmatpush1.msra.mxu0 0.0
        %1073 = vmatprep.subr.mxu0 0.0
        %1074 = vmatpush1.msra.mxu0 0.0
        %1075 = vmatprep.subr.mxu0 0.0
        %1076 = vmatpush1.msra.mxu0 0.0
        %1077 = vmatprep.subr.mxu0 0.0
        %1078 = vmatpush1.msra.mxu0 0.0
        %1079 = vmatprep.subr.mxu0 0.0
        %1080 = vmatpush1.msra.mxu0 0.0
        %1081 = vmatprep.subr.mxu0 0.0
        %1082 = vmatpush1.msra.mxu0 0.0
        %1083 = vmatprep.subr.mxu0 0.0
        %1084 = vmatpush1.msra.mxu0 0.0
        %1085 = vmatprep.subr.mxu0 0.0
        %1086 = vmatpush1.msra.mxu0 0.0
        %1087 = vmatprep.subr.mxu0 0.0
        %1088 = vmatpush1.msra.mxu0 0.0
        %1089 = vmatprep.subr.mxu0 0.0
        %1090 = vmatpush1.msra.mxu0 0.0
        %1091 = vmatprep.subr.mxu0 0.0
        %1092 = vmatpush1.msra.mxu0 0.0
        %1093 = vmatprep.subr.mxu0 0.0
        %1094 = vmatpush1.msra.mxu0 0.0
        %1095 = vmatprep.subr.mxu0 0.0
        %1096 = vmatpush1.msra.mxu0 0.0
        %1097 = vmatprep.subr.mxu0 0.0
        %1098 = vmatpush1.msra.mxu0 0.0
        %1099 = vmatprep.mubr.f32.mxu0 0.0
        %1100 = vmatmul.mubr.f32.gmra.mrb[0].mxu0 %v403
        %v1101 = vpop.f32.mrb[0].mxu0
        %v1102 = vadd.f32 %v380, %v1101
        %v1103 = vpop.f32.mrb[0].mxu0
        %1104 = vdwg.mxu0
        %1105 = vmatprep.subr.mxu0 0.0
        %1106 = vmatpush1.msra.mxu0 %v301
        %1107 = vmatprep.subr.mxu0 0.0
        %1108 = vmatpush1.msra.mxu0 %v302
        %1109 = vmatprep.subr.mxu0 0.0
        %1110 = vmatpush1.msra.mxu0 %v303
        %1111 = vmatprep.subr.mxu0 0.0
        %1112 = vmatpush1.msra.mxu0 %v304
        %1113 = vmatprep.subr.mxu0 0.0
        %1114 = vmatpush1.msra.mxu0 %v305
        %1115 = vmatprep.subr.mxu0 0.0
        %1116 = vmatpush1.msra.mxu0 %v306
        %1117 = vmatprep.subr.mxu0 0.0
        %1118 = vmatpush1.msra.mxu0 %v307
        %1119 = vmatprep.subr.mxu0 0.0
        %1120 = vmatpush1.msra.mxu0 %v308
        %1121 = vmatprep.subr.mxu0 0.0
        %1122 = vmatpush1.msra.mxu0 0.0
        %1123 = vmatprep.subr.mxu0 0.0
        %1124 = vmatpush1.msra.mxu0 0.0
        %1125 = vmatprep.subr.mxu0 0.0
        %1126 = vmatpush1.msra.mxu0 0.0
        %1127 = vmatprep.subr.mxu0 0.0
        %1128 = vmatpush1.msra.mxu0 0.0
        %1129 = vmatprep.subr.mxu0 0.0
        %1130 = vmatpush1.msra.mxu0 0.0
        %1131 = vmatprep.subr.mxu0 0.0
        %1132 = vmatpush1.msra.mxu0 0.0
        %1133 = vmatprep.subr.mxu0 0.0
        %1134 = vmatpush1.msra.mxu0 0.0
        %1135 = vmatprep.subr.mxu0 0.0
        %1136 = vmatpush1.msra.mxu0 0.0
        %1137 = vmatprep.subr.mxu0 0.0
        %1138 = vmatpush1.msra.mxu0 0.0
        %1139 = vmatprep.subr.mxu0 0.0
        %1140 = vmatpush1.msra.mxu0 0.0
        %1141 = vmatprep.subr.mxu0 0.0
        %1142 = vmatpush1.msra.mxu0 0.0
        %1143 = vmatprep.subr.mxu0 0.0
        %1144 = vmatpush1.msra.mxu0 0.0
        %1145 = vmatprep.subr.mxu0 0.0
        %1146 = vmatpush1.msra.mxu0 0.0
        %1147 = vmatprep.subr.mxu0 0.0
        %1148 = vmatpush1.msra.mxu0 0.0
        %1149 = vmatprep.subr.mxu0 0.0
        %1150 = vmatpush1.msra.mxu0 0.0
        %1151 = vmatprep.subr.mxu0 0.0
        %1152 = vmatpush1.msra.mxu0 0.0
        %1153 = vmatprep.subr.mxu0 0.0
        %1154 = vmatpush1.msra.mxu0 0.0
        %1155 = vmatprep.subr.mxu0 0.0
        %1156 = vmatpush1.msra.mxu0 0.0
        %1157 = vmatprep.subr.mxu0 0.0
        %1158 = vmatpush1.msra.mxu0 0.0
        %1159 = vmatprep.subr.mxu0 0.0
        %1160 = vmatpush1.msra.mxu0 0.0
        %1161 = vmatprep.subr.mxu0 0.0
        %1162 = vmatpush1.msra.mxu0 0.0
        %1163 = vmatprep.subr.mxu0 0.0
        %1164 = vmatpush1.msra.mxu0 0.0
        %1165 = vmatprep.subr.mxu0 0.0
        %1166 = vmatpush1.msra.mxu0 0.0
        %1167 = vmatprep.subr.mxu0 0.0
        %1168 = vmatpush1.msra.mxu0 0.0
        %1169 = vmatprep.mubr.f32.mxu0 0.0
        %1170 = vmatmul.mubr.f32.gmra.mrb[0].mxu0 %v403
        %v1171 = vpop.f32.mrb[0].mxu0
        %v1172 = vadd.f32 %v384, %v1171
        %v1173 = vpop.f32.mrb[0].mxu0
        %1174 = vdwg.mxu0
        %1175 = vmatprep.subr.mxu0 0.0
        %1176 = vmatpush1.msra.mxu0 %v309
        %1177 = vmatprep.subr.mxu0 0.0
        %1178 = vmatpush1.msra.mxu0 %v310
        %1179 = vmatprep.subr.mxu0 0.0
        %1180 = vmatpush1.msra.mxu0 %v311
        %1181 = vmatprep.subr.mxu0 0.0
        %1182 = vmatpush1.msra.mxu0 %v312
        %1183 = vmatprep.subr.mxu0 0.0
        %1184 = vmatpush1.msra.mxu0 %v313
        %1185 = vmatprep.subr.mxu0 0.0
        %1186 = vmatpush1.msra.mxu0 %v314
        %1187 = vmatprep.subr.mxu0 0.0
        %1188 = vmatpush1.msra.mxu0 %v315
        %1189 = vmatprep.subr.mxu0 0.0
        %1190 = vmatpush1.msra.mxu0 %v316
        %1191 = vmatprep.subr.mxu0 0.0
        %1192 = vmatpush1.msra.mxu0 0.0
        %1193 = vmatprep.subr.mxu0 0.0
        %1194 = vmatpush1.msra.mxu0 0.0
        %1195 = vmatprep.subr.mxu0 0.0
        %1196 = vmatpush1.msra.mxu0 0.0
        %1197 = vmatprep.subr.mxu0 0.0
        %1198 = vmatpush1.msra.mxu0 0.0
        %1199 = vmatprep.subr.mxu0 0.0
        %1200 = vmatpush1.msra.mxu0 0.0
        %1201 = vmatprep.subr.mxu0 0.0
        %1202 = vmatpush1.msra.mxu0 0.0
        %1203 = vmatprep.subr.mxu0 0.0
        %1204 = vmatpush1.msra.mxu0 0.0
        %1205 = vmatprep.subr.mxu0 0.0
        %1206 = vmatpush1.msra.mxu0 0.0
        %1207 = vmatprep.subr.mxu0 0.0
        %1208 = vmatpush1.msra.mxu0 0.0
        %1209 = vmatprep.subr.mxu0 0.0
        %1210 = vmatpush1.msra.mxu0 0.0
        %1211 = vmatprep.subr.mxu0 0.0
        %1212 = vmatpush1.msra.mxu0 0.0
        %1213 = vmatprep.subr.mxu0 0.0
        %1214 = vmatpush1.msra.mxu0 0.0
        %1215 = vmatprep.subr.mxu0 0.0
        %1216 = vmatpush1.msra.mxu0 0.0
        %1217 = vmatprep.subr.mxu0 0.0
        %1218 = vmatpush1.msra.mxu0 0.0
        %1219 = vmatprep.subr.mxu0 0.0
        %1220 = vmatpush1.msra.mxu0 0.0
        %1221 = vmatprep.subr.mxu0 0.0
        %1222 = vmatpush1.msra.mxu0 0.0
        %1223 = vmatprep.subr.mxu0 0.0
        %1224 = vmatpush1.msra.mxu0 0.0
        %1225 = vmatprep.subr.mxu0 0.0
        %1226 = vmatpush1.msra.mxu0 0.0
        %1227 = vmatprep.subr.mxu0 0.0
        %1228 = vmatpush1.msra.mxu0 0.0
        %1229 = vmatprep.subr.mxu0 0.0
        %1230 = vmatpush1.msra.mxu0 0.0
        %1231 = vmatprep.subr.mxu0 0.0
        %1232 = vmatpush1.msra.mxu0 0.0
        %1233 = vmatprep.subr.mxu0 0.0
        %1234 = vmatpush1.msra.mxu0 0.0
        %1235 = vmatprep.subr.mxu0 0.0
        %1236 = vmatpush1.msra.mxu0 0.0
        %1237 = vmatprep.subr.mxu0 0.0
        %1238 = vmatpush1.msra.mxu0 0.0
        %1239 = vmatprep.mubr.f32.mxu0 0.0
        %1240 = vmatmul.mubr.f32.gmra.mrb[0].mxu0 %v403
        %v1241 = vpop.f32.mrb[0].mxu0
        %v1242 = vadd.f32 %v388, %v1241
        %v1243 = vpop.f32.mrb[0].mxu0
        %1244 = vdwg.mxu0
        %vm1245 = vcmask 130048
        %v1247 = vsel %vm1245, %v472, 0
        %v1250 = vsel %vm1245, %v752, 0
        %1252 = vmatprep.subr.mxu0 0.0
        %1253 = vmatpush1.xpose.msra.mxu0 %v1250
        %1254 = vmatprep.subr.mxu0 0.0
        %1255 = vmatpush1.xpose.msra.mxu0 0.0
        %1256 = vmatprep.subr.mxu0 0.0
        %1257 = vmatpush1.xpose.msra.mxu0 0.0
        %1258 = vmatprep.subr.mxu0 0.0
        %1259 = vmatpush1.xpose.msra.mxu0 0.0
        %1260 = vmatprep.subr.mxu0 0.0
        %1261 = vmatpush1.xpose.msra.mxu0 0.0
        %1262 = vmatprep.subr.mxu0 0.0
        %1263 = vmatpush1.xpose.msra.mxu0 0.0
        %1264 = vmatprep.subr.mxu0 0.0
        %1265 = vmatpush1.xpose.msra.mxu0 0.0
        %1266 = vmatprep.subr.mxu0 0.0
        %1267 = vmatpush1.xpose.msra.mxu0 0.0
        %1268 = vmatprep.subr.mxu0 0.0
        %1269 = vmatpush1.xpose.msra.mxu0 0.0
        %1270 = vmatprep.subr.mxu0 0.0
        %1271 = vmatpush1.xpose.msra.mxu0 0.0
        %1272 = vmatprep.subr.mxu0 0.0
        %1273 = vmatpush1.xpose.msra.mxu0 0.0
        %1274 = vmatprep.subr.mxu0 0.0
        %1275 = vmatpush1.xpose.msra.mxu0 0.0
        %1276 = vmatprep.subr.mxu0 0.0
        %1277 = vmatpush1.xpose.msra.mxu0 0.0
        %1278 = vmatprep.subr.mxu0 0.0
        %1279 = vmatpush1.xpose.msra.mxu0 0.0
        %1280 = vmatprep.subr.mxu0 0.0
        %1281 = vmatpush1.xpose.msra.mxu0 0.0
        %1282 = vmatprep.subr.mxu0 0.0
        %1283 = vmatpush1.xpose.msra.mxu0 0.0
        %1284 = vmatprep.subr.mxu0 0.0
        %1285 = vmatpush1.xpose.msra.mxu0 0.0
        %1286 = vmatprep.subr.mxu0 0.0
        %1287 = vmatpush1.xpose.msra.mxu0 0.0
        %1288 = vmatprep.subr.mxu0 0.0
        %1289 = vmatpush1.xpose.msra.mxu0 0.0
        %1290 = vmatprep.subr.mxu0 0.0
        %1291 = vmatpush1.xpose.msra.mxu0 0.0
        %1292 = vmatprep.subr.mxu0 0.0
        %1293 = vmatpush1.xpose.msra.mxu0 0.0
        %1294 = vmatprep.subr.mxu0 0.0
        %1295 = vmatpush1.xpose.msra.mxu0 0.0
        %1296 = vmatprep.subr.mxu0 0.0
        %1297 = vmatpush1.xpose.msra.mxu0 0.0
        %1298 = vmatprep.subr.mxu0 0.0
        %1299 = vmatpush1.xpose.msra.mxu0 0.0
        %1300 = vmatprep.subr.mxu0 0.0
        %1301 = vmatpush1.xpose.msra.mxu0 0.0
        %1302 = vmatprep.subr.mxu0 0.0
        %1303 = vmatpush1.xpose.msra.mxu0 0.0
        %1304 = vmatprep.subr.mxu0 0.0
        %1305 = vmatpush1.xpose.msra.mxu0 0.0
        %1306 = vmatprep.subr.mxu0 0.0
        %1307 = vmatpush1.xpose.msra.mxu0 0.0
        %1308 = vmatprep.subr.mxu0 0.0
        %1309 = vmatpush1.xpose.msra.mxu0 0.0
        %1310 = vmatprep.subr.mxu0 0.0
        %1311 = vmatpush1.xpose.msra.mxu0 0.0
        %1312 = vmatprep.subr.mxu0 0.0
        %1313 = vmatpush1.xpose.msra.mxu0 0.0
        %1314 = vmatprep.subr.mxu0 0.0
        %1315 = vmatpush1.xpose.msra.mxu0 0.0
        %1316 = vmatprep.mubr.f32.mxu0 0.0
        %1317 = vmatmul.mubr.f32.gmra.mrb[0].mxu0 %v1247
        %v1318 = vpop.f32.mrb[0].mxu0
        %v1319 = vadd.f32 0.0, %v1318
        %v1320 = vpop.f32.mrb[0].mxu0
        %1321 = vdwg.mxu0
        %v1323 = vsel %vm1245, %v542, 0
        %v1326 = vsel %vm1245, %v822, 0
        %1328 = vmatprep.subr.mxu0 0.0
        %1329 = vmatpush1.xpose.msra.mxu0 %v1326
        %1330 = vmatprep.subr.mxu0 0.0
        %1331 = vmatpush1.xpose.msra.mxu0 0.0
        %1332 = vmatprep.subr.mxu0 0.0
        %1333 = vmatpush1.xpose.msra.mxu0 0.0
        %1334 = vmatprep.subr.mxu0 0.0
        %1335 = vmatpush1.xpose.msra.mxu0 0.0
        %1336 = vmatprep.subr.mxu0 0.0
        %1337 = vmatpush1.xpose.msra.mxu0 0.0
        %1338 = vmatprep.subr.mxu0 0.0
        %1339 = vmatpush1.xpose.msra.mxu0 0.0
        %1340 = vmatprep.subr.mxu0 0.0
        %1341 = vmatpush1.xpose.msra.mxu0 0.0
        %1342 = vmatprep.subr.mxu0 0.0
        %1343 = vmatpush1.xpose.msra.mxu0 0.0
        %1344 = vmatprep.subr.mxu0 0.0
        %1345 = vmatpush1.xpose.msra.mxu0 0.0
        %1346 = vmatprep.subr.mxu0 0.0
        %1347 = vmatpush1.xpose.msra.mxu0 0.0
        %1348 = vmatprep.subr.mxu0 0.0
        %1349 = vmatpush1.xpose.msra.mxu0 0.0
        %1350 = vmatprep.subr.mxu0 0.0
        %1351 = vmatpush1.xpose.msra.mxu0 0.0
        %1352 = vmatprep.subr.mxu0 0.0
        %1353 = vmatpush1.xpose.msra.mxu0 0.0
        %1354 = vmatprep.subr.mxu0 0.0
        %1355 = vmatpush1.xpose.msra.mxu0 0.0
        %1356 = vmatprep.subr.mxu0 0.0
        %1357 = vmatpush1.xpose.msra.mxu0 0.0
        %1358 = vmatprep.subr.mxu0 0.0
        %1359 = vmatpush1.xpose.msra.mxu0 0.0
        %1360 = vmatprep.subr.mxu0 0.0
        %1361 = vmatpush1.xpose.msra.mxu0 0.0
        %1362 = vmatprep.subr.mxu0 0.0
        %1363 = vmatpush1.xpose.msra.mxu0 0.0
        %1364 = vmatprep.subr.mxu0 0.0
        %1365 = vmatpush1.xpose.msra.mxu0 0.0
        %1366 = vmatprep.subr.mxu0 0.0
        %1367 = vmatpush1.xpose.msra.mxu0 0.0
        %1368 = vmatprep.subr.mxu0 0.0
        %1369 = vmatpush1.xpose.msra.mxu0 0.0
        %1370 = vmatprep.subr.mxu0 0.0
        %1371 = vmatpush1.xpose.msra.mxu0 0.0
        %1372 = vmatprep.subr.mxu0 0.0
        %1373 = vmatpush1.xpose.msra.mxu0 0.0
        %1374 = vmatprep.subr.mxu0 0.0
        %1375 = vmatpush1.xpose.msra.mxu0 0.0
        %1376 = vmatprep.subr.mxu0 0.0
        %1377 = vmatpush1.xpose.msra.mxu0 0.0
        %1378 = vmatprep.subr.mxu0 0.0
        %1379 = vmatpush1.xpose.msra.mxu0 0.0
        %1380 = vmatprep.subr.mxu0 0.0
        %1381 = vmatpush1.xpose.msra.mxu0 0.0
        %1382 = vmatprep.subr.mxu0 0.0
        %1383 = vmatpush1.xpose.msra.mxu0 0.0
        %1384 = vmatprep.subr.mxu0 0.0
        %1385 = vmatpush1.xpose.msra.mxu0 0.0
        %1386 = vmatprep.subr.mxu0 0.0
        %1387 = vmatpush1.xpose.msra.mxu0 0.0
        %1388 = vmatprep.subr.mxu0 0.0
        %1389 = vmatpush1.xpose.msra.mxu0 0.0
        %1390 = vmatprep.subr.mxu0 0.0
        %1391 = vmatpush1.xpose.msra.mxu0 0.0
        %1392 = vmatprep.mubr.f32.mxu0 0.0
        %1393 = vmatmul.mubr.f32.gmra.mrb[0].mxu0 %v1323
        %v1394 = vpop.f32.mrb[0].mxu0
        %v1395 = vadd.f32 0.0, %v1394
        %v1396 = vpop.f32.mrb[0].mxu0
        %1397 = vdwg.mxu0
        %v1399 = vsel %vm1245, %v612, 0
        %v1402 = vsel %vm1245, %v892, 0
        %1404 = vmatprep.subr.mxu0 0.0
        %1405 = vmatpush1.xpose.msra.mxu0 %v1402
        %1406 = vmatprep.subr.mxu0 0.0
        %1407 = vmatpush1.xpose.msra.mxu0 0.0
        %1408 = vmatprep.subr.mxu0 0.0
        %1409 = vmatpush1.xpose.msra.mxu0 0.0
        %1410 = vmatprep.subr.mxu0 0.0
        %1411 = vmatpush1.xpose.msra.mxu0 0.0
        %1412 = vmatprep.subr.mxu0 0.0
        %1413 = vmatpush1.xpose.msra.mxu0 0.0
        %1414 = vmatprep.subr.mxu0 0.0
        %1415 = vmatpush1.xpose.msra.mxu0 0.0
        %1416 = vmatprep.subr.mxu0 0.0
        %1417 = vmatpush1.xpose.msra.mxu0 0.0
        %1418 = vmatprep.subr.mxu0 0.0
        %1419 = vmatpush1.xpose.msra.mxu0 0.0
        %1420 = vmatprep.subr.mxu0 0.0
        %1421 = vmatpush1.xpose.msra.mxu0 0.0
        %1422 = vmatprep.subr.mxu0 0.0
        %1423 = vmatpush1.xpose.msra.mxu0 0.0
        %1424 = vmatprep.subr.mxu0 0.0
        %1425 = vmatpush1.xpose.msra.mxu0 0.0
        %1426 = vmatprep.subr.mxu0 0.0
        %1427 = vmatpush1.xpose.msra.mxu0 0.0
        %1428 = vmatprep.subr.mxu0 0.0
        %1429 = vmatpush1.xpose.msra.mxu0 0.0
        %1430 = vmatprep.subr.mxu0 0.0
        %1431 = vmatpush1.xpose.msra.mxu0 0.0
        %1432 = vmatprep.subr.mxu0 0.0
        %1433 = vmatpush1.xpose.msra.mxu0 0.0
        %1434 = vmatprep.subr.mxu0 0.0
        %1435 = vmatpush1.xpose.msra.mxu0 0.0
        %1436 = vmatprep.subr.mxu0 0.0
        %1437 = vmatpush1.xpose.msra.mxu0 0.0
        %1438 = vmatprep.subr.mxu0 0.0
        %1439 = vmatpush1.xpose.msra.mxu0 0.0
        %1440 = vmatprep.subr.mxu0 0.0
        %1441 = vmatpush1.xpose.msra.mxu0 0.0
        %1442 = vmatprep.subr.mxu0 0.0
        %1443 = vmatpush1.xpose.msra.mxu0 0.0
        %1444 = vmatprep.subr.mxu0 0.0
        %1445 = vmatpush1.xpose.msra.mxu0 0.0
        %1446 = vmatprep.subr.mxu0 0.0
        %1447 = vmatpush1.xpose.msra.mxu0 0.0
        %1448 = vmatprep.subr.mxu0 0.0
        %1449 = vmatpush1.xpose.msra.mxu0 0.0
        %1450 = vmatprep.subr.mxu0 0.0
        %1451 = vmatpush1.xpose.msra.mxu0 0.0
        %1452 = vmatprep.subr.mxu0 0.0
        %1453 = vmatpush1.xpose.msra.mxu0 0.0
        %1454 = vmatprep.subr.mxu0 0.0
        %1455 = vmatpush1.xpose.msra.mxu0 0.0
        %1456 = vmatprep.subr.mxu0 0.0
        %1457 = vmatpush1.xpose.msra.mxu0 0.0
        %1458 = vmatprep.subr.mxu0 0.0
        %1459 = vmatpush1.xpose.msra.mxu0 0.0
        %1460 = vmatprep.subr.mxu0 0.0
        %1461 = vmatpush1.xpose.msra.mxu0 0.0
        %1462 = vmatprep.subr.mxu0 0.0
        %1463 = vmatpush1.xpose.msra.mxu0 0.0
        %1464 = vmatprep.subr.mxu0 0.0
        %1465 = vmatpush1.xpose.msra.mxu0 0.0
        %1466 = vmatprep.subr.mxu0 0.0
        %1467 = vmatpush1.xpose.msra.mxu0 0.0
        %1468 = vmatprep.mubr.f32.mxu0 0.0
        %1469 = vmatmul.mubr.f32.gmra.mrb[0].mxu0 %v1399
        %v1470 = vpop.f32.mrb[0].mxu0
        %v1471 = vadd.f32 0.0, %v1470
        %v1472 = vpop.f32.mrb[0].mxu0
        %1473 = vdwg.mxu0
        %v1475 = vsel %vm1245, %v682, 0
        %v1478 = vsel %vm1245, %v962, 0
        %1480 = vmatprep.subr.mxu0 0.0
        %1481 = vmatpush1.xpose.msra.mxu0 %v1478
        %1482 = vmatprep.subr.mxu0 0.0
        %1483 = vmatpush1.xpose.msra.mxu0 0.0
        %1484 = vmatprep.subr.mxu0 0.0
        %1485 = vmatpush1.xpose.msra.mxu0 0.0
        %1486 = vmatprep.subr.mxu0 0.0
        %1487 = vmatpush1.xpose.msra.mxu0 0.0
        %1488 = vmatprep.subr.mxu0 0.0
        %1489 = vmatpush1.xpose.msra.mxu0 0.0
        %1490 = vmatprep.subr.mxu0 0.0
        %1491 = vmatpush1.xpose.msra.mxu0 0.0
        %1492 = vmatprep.subr.mxu0 0.0
        %1493 = vmatpush1.xpose.msra.mxu0 0.0
        %1494 = vmatprep.subr.mxu0 0.0
        %1495 = vmatpush1.xpose.msra.mxu0 0.0
        %1496 = vmatprep.subr.mxu0 0.0
        %1497 = vmatpush1.xpose.msra.mxu0 0.0
        %1498 = vmatprep.subr.mxu0 0.0
        %1499 = vmatpush1.xpose.msra.mxu0 0.0
        %1500 = vmatprep.subr.mxu0 0.0
        %1501 = vmatpush1.xpose.msra.mxu0 0.0
        %1502 = vmatprep.subr.mxu0 0.0
        %1503 = vmatpush1.xpose.msra.mxu0 0.0
        %1504 = vmatprep.subr.mxu0 0.0
        %1505 = vmatpush1.xpose.msra.mxu0 0.0
        %1506 = vmatprep.subr.mxu0 0.0
        %1507 = vmatpush1.xpose.msra.mxu0 0.0
        %1508 = vmatprep.subr.mxu0 0.0
        %1509 = vmatpush1.xpose.msra.mxu0 0.0
        %1510 = vmatprep.subr.mxu0 0.0
        %1511 = vmatpush1.xpose.msra.mxu0 0.0
        %1512 = vmatprep.subr.mxu0 0.0
        %1513 = vmatpush1.xpose.msra.mxu0 0.0
        %1514 = vmatprep.subr.mxu0 0.0
        %1515 = vmatpush1.xpose.msra.mxu0 0.0
        %1516 = vmatprep.subr.mxu0 0.0
        %1517 = vmatpush1.xpose.msra.mxu0 0.0
        %1518 = vmatprep.subr.mxu0 0.0
        %1519 = vmatpush1.xpose.msra.mxu0 0.0
        %1520 = vmatprep.subr.mxu0 0.0
        %1521 = vmatpush1.xpose.msra.mxu0 0.0
        %1522 = vmatprep.subr.mxu0 0.0
        %1523 = vmatpush1.xpose.msra.mxu0 0.0
        %1524 = vmatprep.subr.mxu0 0.0
        %1525 = vmatpush1.xpose.msra.mxu0 0.0
        %1526 = vmatprep.subr.mxu0 0.0
        %1527 = vmatpush1.xpose.msra.mxu0 0.0
        %1528 = vmatprep.subr.mxu0 0.0
        %1529 = vmatpush1.xpose.msra.mxu0 0.0
        %1530 = vmatprep.subr.mxu0 0.0
        %1531 = vmatpush1.xpose.msra.mxu0 0.0
        %1532 = vmatprep.subr.mxu0 0.0
        %1533 = vmatpush1.xpose.msra.mxu0 0.0
        %1534 = vmatprep.subr.mxu0 0.0
        %1535 = vmatpush1.xpose.msra.mxu0 0.0
        %1536 = vmatprep.subr.mxu0 0.0
        %1537 = vmatpush1.xpose.msra.mxu0 0.0
        %1538 = vmatprep.subr.mxu0 0.0
        %1539 = vmatpush1.xpose.msra.mxu0 0.0
        %1540 = vmatprep.subr.mxu0 0.0
        %1541 = vmatpush1.xpose.msra.mxu0 0.0
        %1542 = vmatprep.subr.mxu0 0.0
        %1543 = vmatpush1.xpose.msra.mxu0 0.0
        %1544 = vmatprep.mubr.f32.mxu0 0.0
        %1545 = vmatmul.mubr.f32.gmra.mrb[0].mxu0 %v1475
        %v1546 = vpop.f32.mrb[0].mxu0
        %v1547 = vadd.f32 0.0, %v1546
        %v1548 = vpop.f32.mrb[0].mxu0
        %1549 = vdwg.mxu0
        %v1550 = vmul.f32 %v1319, 0.25
        %v1551 = vmul.f32 %v1395, 0.25
        %v1552 = vmul.f32 %v1471, 0.25
        %v1553 = vmul.f32 %v1547, 0.25
        %vm1554 = vcmask 64512
        %v1555 = vsel %vm1554, %v1550, -inf
        %1556 = vmax.xlane.f32.xlu0 %v1555
        %v1557 = vpop.xlane.xlu0 %1556
        %v1558 = vsel %vm1554, %v1551, -inf
        %1559 = vmax.xlane.f32.xlu0 %v1558
        %v1560 = vpop.xlane.xlu0 %1559
        %v1561 = vsel %vm1554, %v1552, -inf
        %1562 = vmax.xlane.f32.xlu0 %v1561
        %v1563 = vpop.xlane.xlu0 %1562
        %v1564 = vsel %vm1554, %v1553, -inf
        %1565 = vmax.xlane.f32.xlu0 %v1564
        %v1566 = vpop.xlane.xlu0 %1565
        %v1567 = vsub.f32 %v1550, %v1557
        %v1568 = vsub.f32 %v1551, %v1560
        %v1569 = vsub.f32 %v1552, %v1563
        %v1570 = vsub.f32 %v1553, %v1566
        %v1571 = vmul.f32 %v1567, 1.442695
        %v1572 = vpow.pop %v1571
        %v1573 = vmul.f32 %v1568, 1.442695
        %v1574 = vpow.pop %v1573
        %v1575 = vmul.f32 %v1569, 1.442695
        %v1576 = vpow.pop %v1575
        %v1577 = vmul.f32 %v1570, 1.442695
        %v1578 = vpow.pop %v1577
        %v1579 = vsel %vm1554, %v1572, 0.0
        %1580 = vadd.xlane.f32.xlu0 %v1579
        %v1581 = vpop.xlane.xlu0 %1580
        %v1582 = vsel %vm1554, %v1574, 0.0
        %1583 = vadd.xlane.f32.xlu0 %v1582
        %v1584 = vpop.xlane.xlu0 %1583
        %v1585 = vsel %vm1554, %v1576, 0.0
        %1586 = vadd.xlane.f32.xlu0 %v1585
        %v1587 = vpop.xlane.xlu0 %1586
        %v1588 = vsel %vm1554, %v1578, 0.0
        %1589 = vadd.xlane.f32.xlu0 %v1588
        %v1590 = vpop.xlane.xlu0 %1589
        %v1591 = vrcp.pop %v1581
        %v1592 = vrcp.pop %v1584
        %v1593 = vrcp.pop %v1587
        %v1594 = vrcp.pop %v1590
        %v1595 = vmul.f32 %v1572, %v1591
        %v1596 = vmul.f32 %v1574, %v1592
        %v1597 = vmul.f32 %v1576, %v1593
        %v1598 = vmul.f32 %v1578, %v1594
        %v1600 = vsel %vm1554, %v1595, 0
        %1602 = vmatprep.subr.mxu0 0.0
        %1603 = vmatpush1.msra.mxu0 %v1032
        %1604 = vmatprep.subr.mxu0 0.0
        %1605 = vmatpush1.msra.mxu0 0.0
        %1606 = vmatprep.subr.mxu0 0.0
        %1607 = vmatpush1.msra.mxu0 0.0
        %1608 = vmatprep.subr.mxu0 0.0
        %1609 = vmatpush1.msra.mxu0 0.0
        %1610 = vmatprep.subr.mxu0 0.0
        %1611 = vmatpush1.msra.mxu0 0.0
        %1612 = vmatprep.subr.mxu0 0.0
        %1613 = vmatpush1.msra.mxu0 0.0
        %1614 = vmatprep.subr.mxu0 0.0
        %1615 = vmatpush1.msra.mxu0 0.0
        %1616 = vmatprep.subr.mxu0 0.0
        %1617 = vmatpush1.msra.mxu0 0.0
        %1618 = vmatprep.subr.mxu0 0.0
        %1619 = vmatpush1.msra.mxu0 0.0
        %1620 = vmatprep.subr.mxu0 0.0
        %1621 = vmatpush1.msra.mxu0 0.0
        %1622 = vmatprep.subr.mxu0 0.0
        %1623 = vmatpush1.msra.mxu0 0.0
        %1624 = vmatprep.subr.mxu0 0.0
        %1625 = vmatpush1.msra.mxu0 0.0
        %1626 = vmatprep.subr.mxu0 0.0
        %1627 = vmatpush1.msra.mxu0 0.0
        %1628 = vmatprep.subr.mxu0 0.0
        %1629 = vmatpush1.msra.mxu0 0.0
        %1630 = vmatprep.subr.mxu0 0.0
        %1631 = vmatpush1.msra.mxu0 0.0
        %1632 = vmatprep.subr.mxu0 0.0
        %1633 = vmatpush1.msra.mxu0 0.0
        %1634 = vmatprep.subr.mxu0 0.0
        %1635 = vmatpush1.msra.mxu0 0.0
        %1636 = vmatprep.subr.mxu0 0.0
        %1637 = vmatpush1.msra.mxu0 0.0
        %1638 = vmatprep.subr.mxu0 0.0
        %1639 = vmatpush1.msra.mxu0 0.0
        %1640 = vmatprep.subr.mxu0 0.0
        %1641 = vmatpush1.msra.mxu0 0.0
        %1642 = vmatprep.subr.mxu0 0.0
        %1643 = vmatpush1.msra.mxu0 0.0
        %1644 = vmatprep.subr.mxu0 0.0
        %1645 = vmatpush1.msra.mxu0 0.0
        %1646 = vmatprep.subr.mxu0 0.0
        %1647 = vmatpush1.msra.mxu0 0.0
        %1648 = vmatprep.subr.mxu0 0.0
        %1649 = vmatpush1.msra.mxu0 0.0
        %1650 = vmatprep.subr.mxu0 0.0
        %1651 = vmatpush1.msra.mxu0 0.0
        %1652 = vmatprep.subr.mxu0 0.0
        %1653 = vmatpush1.msra.mxu0 0.0
        %1654 = vmatprep.subr.mxu0 0.0
        %1655 = vmatpush1.msra.mxu0 0.0
        %1656 = vmatprep.subr.mxu0 0.0
        %1657 = vmatpush1.msra.mxu0 0.0
        %1658 = vmatprep.subr.mxu0 0.0
        %1659 = vmatpush1.msra.mxu0 0.0
        %1660 = vmatprep.subr.mxu0 0.0
        %1661 = vmatpush1.msra.mxu0 0.0
        %1662 = vmatprep.subr.mxu0 0.0
        %1663 = vmatpush1.msra.mxu0 0.0
        %1664 = vmatprep.subr.mxu0 0.0
        %1665 = vmatpush1.msra.mxu0 0.0
        %1666 = vmatprep.mubr.f32.mxu0 0.0
        %1667 = vmatmul.mubr.f32.gmra.mrb[0].mxu0 %v1600
        %v1668 = vpop.f32.mrb[0].mxu0
        %v1669 = vadd.f32 0.0, %v1668
        %v1670 = vpop.f32.mrb[0].mxu0
        %1671 = vdwg.mxu0
        %v1673 = vsel %vm1554, %v1596, 0
        %1675 = vmatprep.subr.mxu0 0.0
        %1676 = vmatpush1.msra.mxu0 %v1102
        %1677 = vmatprep.subr.mxu0 0.0
        %1678 = vmatpush1.msra.mxu0 0.0
        %1679 = vmatprep.subr.mxu0 0.0
        %1680 = vmatpush1.msra.mxu0 0.0
        %1681 = vmatprep.subr.mxu0 0.0
        %1682 = vmatpush1.msra.mxu0 0.0
        %1683 = vmatprep.subr.mxu0 0.0
        %1684 = vmatpush1.msra.mxu0 0.0
        %1685 = vmatprep.subr.mxu0 0.0
        %1686 = vmatpush1.msra.mxu0 0.0
        %1687 = vmatprep.subr.mxu0 0.0
        %1688 = vmatpush1.msra.mxu0 0.0
        %1689 = vmatprep.subr.mxu0 0.0
        %1690 = vmatpush1.msra.mxu0 0.0
        %1691 = vmatprep.subr.mxu0 0.0
        %1692 = vmatpush1.msra.mxu0 0.0
        %1693 = vmatprep.subr.mxu0 0.0
        %1694 = vmatpush1.msra.mxu0 0.0
        %1695 = vmatprep.subr.mxu0 0.0
        %1696 = vmatpush1.msra.mxu0 0.0
        %1697 = vmatprep.subr.mxu0 0.0
        %1698 = vmatpush1.msra.mxu0 0.0
        %1699 = vmatprep.subr.mxu0 0.0
        %1700 = vmatpush1.msra.mxu0 0.0
        %1701 = vmatprep.subr.mxu0 0.0
        %1702 = vmatpush1.msra.mxu0 0.0
        %1703 = vmatprep.subr.mxu0 0.0
        %1704 = vmatpush1.msra.mxu0 0.0
        %1705 = vmatprep.subr.mxu0 0.0
        %1706 = vmatpush1.msra.mxu0 0.0
        %1707 = vmatprep.subr.mxu0 0.0
        %1708 = vmatpush1.msra.mxu0 0.0
        %1709 = vmatprep.subr.mxu0 0.0
        %1710 = vmatpush1.msra.mxu0 0.0
        %1711 = vmatprep.subr.mxu0 0.0
        %1712 = vmatpush1.msra.mxu0 0.0
        %1713 = vmatprep.subr.mxu0 0.0
        %1714 = vmatpush1.msra.mxu0 0.0
        %1715 = vmatprep.subr.mxu0 0.0
        %1716 = vmatpush1.msra.mxu0 0.0
        %1717 = vmatprep.subr.mxu0 0.0
        %1718 = vmatpush1.msra.mxu0 0.0
        %1719 = vmatprep.subr.mxu0 0.0
        %1720 = vmatpush1.msra.mxu0 0.0
        %1721 = vmatprep.subr.mxu0 0.0
        %1722 = vmatpush1.msra.mxu0 0.0
        %1723 = vmatprep.subr.mxu0 0.0
        %1724 = vmatpush1.msra.mxu0 0.0
        %1725 = vmatprep.subr.mxu0 0.0
        %1726 = vmatpush1.msra.mxu0 0.0
        %1727 = vmatprep.subr.mxu0 0.0
        %1728 = vmatpush1.msra.mxu0 0.0
        %1729 = vmatprep.subr.mxu0 0.0
        %1730 = vmatpush1.msra.mxu0 0.0
        %1731 = vmatprep.subr.mxu0 0.0
        %1732 = vmatpush1.msra.mxu0 0.0
        %1733 = vmatprep.subr.mxu0 0.0
        %1734 = vmatpush1.msra.mxu0 0.0
        %1735 = vmatprep.subr.mxu0 0.0
        %1736 = vmatpush1.msra.mxu0 0.0
        %1737 = vmatprep.subr.mxu0 0.0
        %1738 = vmatpush1.msra.mxu0 0.0
        %1739 = vmatprep.mubr.f32.mxu0 0.0
        %1740 = vmatmul.mubr.f32.gmra.mrb[0].mxu0 %v1673
        %v1741 = vpop.f32.mrb[0].mxu0
        %v1742 = vadd.f32 0.0, %v1741
        %v1743 = vpop.f32.mrb[0].mxu0
        %1744 = vdwg.mxu0
        %v1746 = vsel %vm1554, %v1597, 0
        %1748 = vmatprep.subr.mxu0 0.0
        %1749 = vmatpush1.msra.mxu0 %v1172
        %1750 = vmatprep.subr.mxu0 0.0
        %1751 = vmatpush1.msra.mxu0 0.0
        %1752 = vmatprep.subr.mxu0 0.0
        %1753 = vmatpush1.msra.mxu0 0.0
        %1754 = vmatprep.subr.mxu0 0.0
        %1755 = vmatpush1.msra.mxu0 0.0
        %1756 = vmatprep.subr.mxu0 0.0
        %1757 = vmatpush1.msra.mxu0 0.0
        %1758 = vmatprep.subr.mxu0 0.0
        %1759 = vmatpush1.msra.mxu0 0.0
        %1760 = vmatprep.subr.mxu0 0.0
        %1761 = vmatpush1.msra.mxu0 0.0
        %1762 = vmatprep.subr.mxu0 0.0
        %1763 = vmatpush1.msra.mxu0 0.0
        %1764 = vmatprep.subr.mxu0 0.0
        %1765 = vmatpush1.msra.mxu0 0.0
        %1766 = vmatprep.subr.mxu0 0.0
        %1767 = vmatpush1.msra.mxu0 0.0
        %1768 = vmatprep.subr.mxu0 0.0
        %1769 = vmatpush1.msra.mxu0 0.0
        %1770 = vmatprep.subr.mxu0 0.0
        %1771 = vmatpush1.msra.mxu0 0.0
        %1772 = vmatprep.subr.mxu0 0.0
        %1773 = vmatpush1.msra.mxu0 0.0
        %1774 = vmatprep.subr.mxu0 0.0
        %1775 = vmatpush1.msra.mxu0 0.0
        %1776 = vmatprep.subr.mxu0 0.0
        %1777 = vmatpush1.msra.mxu0 0.0
        %1778 = vmatprep.subr.mxu0 0.0
        %1779 = vmatpush1.msra.mxu0 0.0
        %1780 = vmatprep.subr.mxu0 0.0
        %1781 = vmatpush1.msra.mxu0 0.0
        %1782 = vmatprep.subr.mxu0 0.0
        %1783 = vmatpush1.msra.mxu0 0.0
        %1784 = vmatprep.subr.mxu0 0.0
        %1785 = vmatpush1.msra.mxu0 0.0
        %1786 = vmatprep.subr.mxu0 0.0
        %1787 = vmatpush1.msra.mxu0 0.0
        %1788 = vmatprep.subr.mxu0 0.0
        %1789 = vmatpush1.msra.mxu0 0.0
        %1790 = vmatprep.subr.mxu0 0.0
        %1791 = vmatpush1.msra.mxu0 0.0
        %1792 = vmatprep.subr.mxu0 0.0
        %1793 = vmatpush1.msra.mxu0 0.0
        %1794 = vmatprep.subr.mxu0 0.0
        %1795 = vmatpush1.msra.mxu0 0.0
        %1796 = vmatprep.subr.mxu0 0.0
        %1797 = vmatpush1.msra.mxu0 0.0
        %1798 = vmatprep.subr.mxu0 0.0
        %1799 = vmatpush1.msra.mxu0 0.0
        %1800 = vmatprep.subr.mxu0 0.0
        %1801 = vmatpush1.msra.mxu0 0.0
        %1802 = vmatprep.subr.mxu0 0.0
        %1803 = vmatpush1.msra.mxu0 0.0
        %1804 = vmatprep.subr.mxu0 0.0
        %1805 = vmatpush1.msra.mxu0 0.0
        %1806 = vmatprep.subr.mxu0 0.0
        %1807 = vmatpush1.msra.mxu0 0.0
        %1808 = vmatprep.subr.mxu0 0.0
        %1809 = vmatpush1.msra.mxu0 0.0
        %1810 = vmatprep.subr.mxu0 0.0
        %1811 = vmatpush1.msra.mxu0 0.0
        %1812 = vmatprep.mubr.f32.mxu0 0.0
        %1813 = vmatmul.mubr.f32.gmra.mrb[0].mxu0 %v1746
        %v1814 = vpop.f32.mrb[0].mxu0
        %v1815 = vadd.f32 0.0, %v1814
        %v1816 = vpop.f32.mrb[0].mxu0
        %1817 = vdwg.mxu0
        %v1819 = vsel %vm1554, %v1598, 0
        %1821 = vmatprep.subr.mxu0 0.0
        %1822 = vmatpush1.msra.mxu0 %v1242
        %1823 = vmatprep.subr.mxu0 0.0
        %1824 = vmatpush1.msra.mxu0 0.0
        %1825 = vmatprep.subr.mxu0 0.0
        %1826 = vmatpush1.msra.mxu0 0.0
        %1827 = vmatprep.subr.mxu0 0.0
        %1828 = vmatpush1.msra.mxu0 0.0
        %1829 = vmatprep.subr.mxu0 0.0
        %1830 = vmatpush1.msra.mxu0 0.0
        %1831 = vmatprep.subr.mxu0 0.0
        %1832 = vmatpush1.msra.mxu0 0.0
        %1833 = vmatprep.subr.mxu0 0.0
        %1834 = vmatpush1.msra.mxu0 0.0
        %1835 = vmatprep.subr.mxu0 0.0
        %1836 = vmatpush1.msra.mxu0 0.0
        %1837 = vmatprep.subr.mxu0 0.0
        %1838 = vmatpush1.msra.mxu0 0.0
        %1839 = vmatprep.subr.mxu0 0.0
        %1840 = vmatpush1.msra.mxu0 0.0
        %1841 = vmatprep.subr.mxu0 0.0
        %1842 = vmatpush1.msra.mxu0 0.0
        %1843 = vmatprep.subr.mxu0 0.0
        %1844 = vmatpush1.msra.mxu0 0.0
        %1845 = vmatprep.subr.mxu0 0.0
        %1846 = vmatpush1.msra.mxu0 0.0
        %1847 = vmatprep.subr.mxu0 0.0
        %1848 = vmatpush1.msra.mxu0 0.0
        %1849 = vmatprep.subr.mxu0 0.0
        %1850 = vmatpush1.msra.mxu0 0.0
        %1851 = vmatprep.subr.mxu0 0.0
        %1852 = vmatpush1.msra.mxu0 0.0
        %1853 = vmatprep.subr.mxu0 0.0
        %1854 = vmatpush1.msra.mxu0 0.0
        %1855 = vmatprep.subr.mxu0 0.0
        %1856 = vmatpush1.msra.mxu0 0.0
        %1857 = vmatprep.subr.mxu0 0.0
        %1858 = vmatpush1.msra.mxu0 0.0
        %1859 = vmatprep.subr.mxu0 0.0
        %1860 = vmatpush1.msra.mxu0 0.0
        %1861 = vmatprep.subr.mxu0 0.0
        %1862 = vmatpush1.msra.mxu0 0.0
        %1863 = vmatprep.subr.mxu0 0.0
        %1864 = vmatpush1.msra.mxu0 0.0
        %1865 = vmatprep.subr.mxu0 0.0
        %1866 = vmatpush1.msra.mxu0 0.0
        %1867 = vmatprep.subr.mxu0 0.0
        %1868 = vmatpush1.msra.mxu0 0.0
        %1869 = vmatprep.subr.mxu0 0.0
        %1870 = vmatpush1.msra.mxu0 0.0
        %1871 = vmatprep.subr.mxu0 0.0
        %1872 = vmatpush1.msra.mxu0 0.0
        %1873 = vmatprep.subr.mxu0 0.0
        %1874 = vmatpush1.msra.mxu0 0.0
        %1875 = vmatprep.subr.mxu0 0.0
        %1876 = vmatpush1.msra.mxu0 0.0
        %1877 = vmatprep.subr.mxu0 0.0
        %1878 = vmatpush1.msra.mxu0 0.0
        %1879 = vmatprep.subr.mxu0 0.0
        %1880 = vmatpush1.msra.mxu0 0.0
        %1881 = vmatprep.subr.mxu0 0.0
        %1882 = vmatpush1.msra.mxu0 0.0
        %1883 = vmatprep.subr.mxu0 0.0
        %1884 = vmatpush1.msra.mxu0 0.0
        %1885 = vmatprep.mubr.f32.mxu0 0.0
        %1886 = vmatmul.mubr.f32.gmra.mrb[0].mxu0 %v1819
        %v1887 = vpop.f32.mrb[0].mxu0
        %v1888 = vadd.f32 0.0, %v1887
        %v1889 = vpop.f32.mrb[0].mxu0
        %1890 = vdwg.mxu0
        %v1891 = vld [vmem:[%s3] sm:$0xff]
        %v1892 = vld [vmem:[%s3 + $0x8] sm:$0xff]
        %v1893 = vld [vmem:[%s3 + $0x10] sm:$0xff]
        %v1894 = vld [vmem:[%s3 + $0x18] sm:$0xff]
        %v1895 = vld [vmem:[%s3 + $0x20] sm:$0xff]
        %v1896 = vld [vmem:[%s3 + $0x28] sm:$0xff]
        %v1897 = vld [vmem:[%s3 + $0x30] sm:$0xff]
        %v1898 = vld [vmem:[%s3 + $0x38] sm:$0xff]
        %v1899 = vld [vmem:[%s3 + $0x40] sm:$0xff]
        %v1900 = vld [vmem:[%s3 + $0x48] sm:$0xff]
        %v1901 = vld [vmem:[%s3 + $0x50] sm:$0xff]
        %v1902 = vld [vmem:[%s3 + $0x58] sm:$0xff]
        %v1903 = vld [vmem:[%s3 + $0x60] sm:$0xff]
        %v1904 = vld [vmem:[%s3 + $0x68] sm:$0xff]
        %v1905 = vld [vmem:[%s3 + $0x70] sm:$0xff]
        %v1906 = vld [vmem:[%s3 + $0x78] sm:$0xff]
        %v1908 = vsel %vm1245, %v1669, 0
        %1910 = vmatprep.subr.mxu0 %v1892
        %1911 = vmatpush1.msra.mxu0 %v1891
        %1912 = vmatprep.subr.mxu0 %v1894
        %1913 = vmatpush1.msra.mxu0 %v1893
        %1914 = vmatprep.subr.mxu0 0.0
        %1915 = vmatpush1.msra.mxu0 0.0
        %1916 = vmatprep.subr.mxu0 0.0
        %1917 = vmatpush1.msra.mxu0 0.0
        %1918 = vmatprep.subr.mxu0 0.0
        %1919 = vmatpush1.msra.mxu0 0.0
        %1920 = vmatprep.subr.mxu0 0.0
        %1921 = vmatpush1.msra.mxu0 0.0
        %1922 = vmatprep.subr.mxu0 0.0
        %1923 = vmatpush1.msra.mxu0 0.0
        %1924 = vmatprep.subr.mxu0 0.0
        %1925 = vmatpush1.msra.mxu0 0.0
        %1926 = vmatprep.subr.mxu0 0.0
        %1927 = vmatpush1.msra.mxu0 0.0
        %1928 = vmatprep.subr.mxu0 0.0
        %1929 = vmatpush1.msra.mxu0 0.0
        %1930 = vmatprep.subr.mxu0 0.0
        %1931 = vmatpush1.msra.mxu0 0.0
        %1932 = vmatprep.subr.mxu0 0.0
        %1933 = vmatpush1.msra.mxu0 0.0
        %1934 = vmatprep.subr.mxu0 0.0
        %1935 = vmatpush1.msra.mxu0 0.0
        %1936 = vmatprep.subr.mxu0 0.0
        %1937 = vmatpush1.msra.mxu0 0.0
        %1938 = vmatprep.subr.mxu0 0.0
        %1939 = vmatpush1.msra.mxu0 0.0
        %1940 = vmatprep.subr.mxu0 0.0
        %1941 = vmatpush1.msra.mxu0 0.0
        %1942 = vmatprep.subr.mxu0 0.0
        %1943 = vmatpush1.msra.mxu0 0.0
        %1944 = vmatprep.subr.mxu0 0.0
        %1945 = vmatpush1.msra.mxu0 0.0
        %1946 = vmatprep.subr.mxu0 0.0
        %1947 = vmatpush1.msra.mxu0 0.0
        %1948 = vmatprep.subr.mxu0 0.0
        %1949 = vmatpush1.msra.mxu0 0.0
        %1950 = vmatprep.subr.mxu0 0.0
        %1951 = vmatpush1.msra.mxu0 0.0
        %1952 = vmatprep.subr.mxu0 0.0
        %1953 = vmatpush1.msra.mxu0 0.0
        %1954 = vmatprep.subr.mxu0 0.0
        %1955 = vmatpush1.msra.mxu0 0.0
        %1956 = vmatprep.subr.mxu0 0.0
        %1957 = vmatpush1.msra.mxu0 0.0
        %1958 = vmatprep.subr.mxu0 0.0
        %1959 = vmatpush1.msra.mxu0 0.0
        %1960 = vmatprep.subr.mxu0 0.0
        %1961 = vmatpush1.msra.mxu0 0.0
        %1962 = vmatprep.subr.mxu0 0.0
        %1963 = vmatpush1.msra.mxu0 0.0
        %1964 = vmatprep.subr.mxu0 0.0
        %1965 = vmatpush1.msra.mxu0 0.0
        %1966 = vmatprep.subr.mxu0 0.0
        %1967 = vmatpush1.msra.mxu0 0.0
        %1968 = vmatprep.subr.mxu0 0.0
        %1969 = vmatpush1.msra.mxu0 0.0
        %1970 = vmatprep.subr.mxu0 0.0
        %1971 = vmatpush1.msra.mxu0 0.0
        %1972 = vmatprep.subr.mxu0 0.0
        %1973 = vmatpush1.msra.mxu0 0.0
        %1974 = vmatprep.mubr.f32.mxu0 0.0
        %1975 = vmatmul.mubr.f32.gmra.mrb[0].mxu0 %v1908
        %v1976 = vpop.f32.mrb[0].mxu0
        %v1977 = vadd.f32 0.0, %v1976
        %v1978 = vpop.f32.mrb[0].mxu0
        %v1979 = vadd.f32 0.0, %v1978
        %1980 = vdwg.mxu0
        %v1982 = vsel %vm1245, %v1742, 0
        %1984 = vmatprep.subr.mxu0 %v1896
        %1985 = vmatpush1.msra.mxu0 %v1895
        %1986 = vmatprep.subr.mxu0 %v1898
        %1987 = vmatpush1.msra.mxu0 %v1897
        %1988 = vmatprep.subr.mxu0 0.0
        %1989 = vmatpush1.msra.mxu0 0.0
        %1990 = vmatprep.subr.mxu0 0.0
        %1991 = vmatpush1.msra.mxu0 0.0
        %1992 = vmatprep.subr.mxu0 0.0
        %1993 = vmatpush1.msra.mxu0 0.0
        %1994 = vmatprep.subr.mxu0 0.0
        %1995 = vmatpush1.msra.mxu0 0.0
        %1996 = vmatprep.subr.mxu0 0.0
        %1997 = vmatpush1.msra.mxu0 0.0
        %1998 = vmatprep.subr.mxu0 0.0
        %1999 = vmatpush1.msra.mxu0 0.0
        %2000 = vmatprep.subr.mxu0 0.0
        %2001 = vmatpush1.msra.mxu0 0.0
        %2002 = vmatprep.subr.mxu0 0.0
        %2003 = vmatpush1.msra.mxu0 0.0
        %2004 = vmatprep.subr.mxu0 0.0
        %2005 = vmatpush1.msra.mxu0 0.0
        %2006 = vmatprep.subr.mxu0 0.0
        %2007 = vmatpush1.msra.mxu0 0.0
        %2008 = vmatprep.subr.mxu0 0.0
        %2009 = vmatpush1.msra.mxu0 0.0
        %2010 = vmatprep.subr.mxu0 0.0
        %2011 = vmatpush1.msra.mxu0 0.0
        %2012 = vmatprep.subr.mxu0 0.0
        %2013 = vmatpush1.msra.mxu0 0.0
        %2014 = vmatprep.subr.mxu0 0.0
        %2015 = vmatpush1.msra.mxu0 0.0
        %2016 = vmatprep.subr.mxu0 0.0
        %2017 = vmatpush1.msra.mxu0 0.0
        %2018 = vmatprep.subr.mxu0 0.0
        %2019 = vmatpush1.msra.mxu0 0.0
        %2020 = vmatprep.subr.mxu0 0.0
        %2021 = vmatpush1.msra.mxu0 0.0
        %2022 = vmatprep.subr.mxu0 0.0
        %2023 = vmatpush1.msra.mxu0 0.0
        %2024 = vmatprep.subr.mxu0 0.0
        %2025 = vmatpush1.msra.mxu0 0.0
        %2026 = vmatprep.subr.mxu0 0.0
        %2027 = vmatpush1.msra.mxu0 0.0
        %2028 = vmatprep.subr.mxu0 0.0
        %2029 = vmatpush1.msra.mxu0 0.0
        %2030 = vmatprep.subr.mxu0 0.0
        %2031 = vmatpush1.msra.mxu0 0.0
        %2032 = vmatprep.subr.mxu0 0.0
        %2033 = vmatpush1.msra.mxu0 0.0
        %2034 = vmatprep.subr.mxu0 0.0
        %2035 = vmatpush1.msra.mxu0 0.0
        %2036 = vmatprep.subr.mxu0 0.0
        %2037 = vmatpush1.msra.mxu0 0.0
        %2038 = vmatprep.subr.mxu0 0.0
        %2039 = vmatpush1.msra.mxu0 0.0
        %2040 = vmatprep.subr.mxu0 0.0
        %2041 = vmatpush1.msra.mxu0 0.0
        %2042 = vmatprep.subr.mxu0 0.0
        %2043 = vmatpush1.msra.mxu0 0.0
        %2044 = vmatprep.subr.mxu0 0.0
        %2045 = vmatpush1.msra.mxu0 0.0
        %2046 = vmatprep.subr.mxu0 0.0
        %2047 = vmatpush1.msra.mxu0 0.0
        %2048 = vmatprep.mubr.f32.mxu0 0.0
        %2049 = vmatmul.mubr.f32.gmra.mrb[0].mxu0 %v1982
        %v2050 = vpop.f32.mrb[0].mxu0
        %v2051 = vadd.f32 0.0, %v2050
        %v2052 = vpop.f32.mrb[0].mxu0
        %v2053 = vadd.f32 0.0, %v2052
        %2054 = vdwg.mxu0
        %v2056 = vsel %vm1245, %v1815, 0
        %2058 = vmatprep.subr.mxu0 %v1900
        %2059 = vmatpush1.msra.mxu0 %v1899
        %2060 = vmatprep.subr.mxu0 %v1902
        %2061 = vmatpush1.msra.mxu0 %v1901
        %2062 = vmatprep.subr.mxu0 0.0
        %2063 = vmatpush1.msra.mxu0 0.0
        %2064 = vmatprep.subr.mxu0 0.0
        %2065 = vmatpush1.msra.mxu0 0.0
        %2066 = vmatprep.subr.mxu0 0.0
        %2067 = vmatpush1.msra.mxu0 0.0
        %2068 = vmatprep.subr.mxu0 0.0
        %2069 = vmatpush1.msra.mxu0 0.0
        %2070 = vmatprep.subr.mxu0 0.0
        %2071 = vmatpush1.msra.mxu0 0.0
        %2072 = vmatprep.subr.mxu0 0.0
        %2073 = vmatpush1.msra.mxu0 0.0
        %2074 = vmatprep.subr.mxu0 0.0
        %2075 = vmatpush1.msra.mxu0 0.0
        %2076 = vmatprep.subr.mxu0 0.0
        %2077 = vmatpush1.msra.mxu0 0.0
        %2078 = vmatprep.subr.mxu0 0.0
        %2079 = vmatpush1.msra.mxu0 0.0
        %2080 = vmatprep.subr.mxu0 0.0
        %2081 = vmatpush1.msra.mxu0 0.0
        %2082 = vmatprep.subr.mxu0 0.0
        %2083 = vmatpush1.msra.mxu0 0.0
        %2084 = vmatprep.subr.mxu0 0.0
        %2085 = vmatpush1.msra.mxu0 0.0
        %2086 = vmatprep.subr.mxu0 0.0
        %2087 = vmatpush1.msra.mxu0 0.0
        %2088 = vmatprep.subr.mxu0 0.0
        %2089 = vmatpush1.msra.mxu0 0.0
        %2090 = vmatprep.subr.mxu0 0.0
        %2091 = vmatpush1.msra.mxu0 0.0
        %2092 = vmatprep.subr.mxu0 0.0
        %2093 = vmatpush1.msra.mxu0 0.0
        %2094 = vmatprep.subr.mxu0 0.0
        %2095 = vmatpush1.msra.mxu0 0.0
        %2096 = vmatprep.subr.mxu0 0.0
        %2097 = vmatpush1.msra.mxu0 0.0
        %2098 = vmatprep.subr.mxu0 0.0
        %2099 = vmatpush1.msra.mxu0 0.0
        %2100 = vmatprep.subr.mxu0 0.0
        %2101 = vmatpush1.msra.mxu0 0.0
        %2102 = vmatprep.subr.mxu0 0.0
        %2103 = vmatpush1.msra.mxu0 0.0
        %2104 = vmatprep.subr.mxu0 0.0
        %2105 = vmatpush1.msra.mxu0 0.0
        %2106 = vmatprep.subr.mxu0 0.0
        %2107 = vmatpush1.msra.mxu0 0.0
        %2108 = vmatprep.subr.mxu0 0.0
        %2109 = vmatpush1.msra.mxu0 0.0
        %2110 = vmatprep.subr.mxu0 0.0
        %2111 = vmatpush1.msra.mxu0 0.0
        %2112 = vmatprep.subr.mxu0 0.0
        %2113 = vmatpush1.msra.mxu0 0.0
        %2114 = vmatprep.subr.mxu0 0.0
        %2115 = vmatpush1.msra.mxu0 0.0
        %2116 = vmatprep.subr.mxu0 0.0
        %2117 = vmatpush1.msra.mxu0 0.0
        %2118 = vmatprep.subr.mxu0 0.0
        %2119 = vmatpush1.msra.mxu0 0.0
        %2120 = vmatprep.subr.mxu0 0.0
        %2121 = vmatpush1.msra.mxu0 0.0
        %2122 = vmatprep.mubr.f32.mxu0 0.0
        %2123 = vmatmul.mubr.f32.gmra.mrb[0].mxu0 %v2056
        %v2124 = vpop.f32.mrb[0].mxu0
        %v2125 = vadd.f32 0.0, %v2124
        %v2126 = vpop.f32.mrb[0].mxu0
        %v2127 = vadd.f32 0.0, %v2126
        %2128 = vdwg.mxu0
        %v2130 = vsel %vm1245, %v1888, 0
        %2132 = vmatprep.subr.mxu0 %v1904
        %2133 = vmatpush1.msra.mxu0 %v1903
        %2134 = vmatprep.subr.mxu0 %v1906
        %2135 = vmatpush1.msra.mxu0 %v1905
        %2136 = vmatprep.subr.mxu0 0.0
        %2137 = vmatpush1.msra.mxu0 0.0
        %2138 = vmatprep.subr.mxu0 0.0
        %2139 = vmatpush1.msra.mxu0 0.0
        %2140 = vmatprep.subr.mxu0 0.0
        %2141 = vmatpush1.msra.mxu0 0.0
        %2142 = vmatprep.subr.mxu0 0.0
        %2143 = vmatpush1.msra.mxu0 0.0
        %2144 = vmatprep.subr.mxu0 0.0
        %2145 = vmatpush1.msra.mxu0 0.0
        %2146 = vmatprep.subr.mxu0 0.0
        %2147 = vmatpush1.msra.mxu0 0.0
        %2148 = vmatprep.subr.mxu0 0.0
        %2149 = vmatpush1.msra.mxu0 0.0
        %2150 = vmatprep.subr.mxu0 0.0
        %2151 = vmatpush1.msra.mxu0 0.0
        %2152 = vmatprep.subr.mxu0 0.0
        %2153 = vmatpush1.msra.mxu0 0.0
        %2154 = vmatprep.subr.mxu0 0.0
        %2155 = vmatpush1.msra.mxu0 0.0
        %2156 = vmatprep.subr.mxu0 0.0
        %2157 = vmatpush1.msra.mxu0 0.0
        %2158 = vmatprep.subr.mxu0 0.0
        %2159 = vmatpush1.msra.mxu0 0.0
        %2160 = vmatprep.subr.mxu0 0.0
        %2161 = vmatpush1.msra.mxu0 0.0
        %2162 = vmatprep.subr.mxu0 0.0
        %2163 = vmatpush1.msra.mxu0 0.0
        %2164 = vmatprep.subr.mxu0 0.0
        %2165 = vmatpush1.msra.mxu0 0.0
        %2166 = vmatprep.subr.mxu0 0.0
        %2167 = vmatpush1.msra.mxu0 0.0
        %2168 = vmatprep.subr.mxu0 0.0
        %2169 = vmatpush1.msra.mxu0 0.0
        %2170 = vmatprep.subr.mxu0 0.0
        %2171 = vmatpush1.msra.mxu0 0.0
        %2172 = vmatprep.subr.mxu0 0.0
        %2173 = vmatpush1.msra.mxu0 0.0
        %2174 = vmatprep.subr.mxu0 0.0
        %2175 = vmatpush1.msra.mxu0 0.0
        %2176 = vmatprep.subr.mxu0 0.0
        %2177 = vmatpush1.msra.mxu0 0.0
        %2178 = vmatprep.subr.mxu0 0.0
        %2179 = vmatpush1.msra.mxu0 0.0
        %2180 = vmatprep.subr.mxu0 0.0
        %2181 = vmatpush1.msra.mxu0 0.0
        %2182 = vmatprep.subr.mxu0 0.0
        %2183 = vmatpush1.msra.mxu0 0.0
        %2184 = vmatprep.subr.mxu0 0.0
        %2185 = vmatpush1.msra.mxu0 0.0
        %2186 = vmatprep.subr.mxu0 0.0
        %2187 = vmatpush1.msra.mxu0 0.0
        %2188 = vmatprep.subr.mxu0 0.0
        %2189 = vmatpush1.msra.mxu0 0.0
        %2190 = vmatprep.subr.mxu0 0.0
        %2191 = vmatpush1.msra.mxu0 0.0
        %2192 = vmatprep.subr.mxu0 0.0
        %2193 = vmatpush1.msra.mxu0 0.0
        %2194 = vmatprep.subr.mxu0 0.0
        %2195 = vmatpush1.msra.mxu0 0.0
        %2196 = vmatprep.mubr.f32.mxu0 0.0
        %2197 = vmatmul.mubr.f32.gmra.mrb[0].mxu0 %v2130
        %v2198 = vpop.f32.mrb[0].mxu0
        %v2199 = vadd.f32 0.0, %v2198
        %v2200 = vpop.f32.mrb[0].mxu0
        %v2201 = vadd.f32 0.0, %v2200
        %2202 = vdwg.mxu0
        %v2203 = vadd.f32 %v1977, %v2051
        %v2204 = vadd.f32 %v2203, %v2125
        %v2205 = vadd.f32 %v2204, %v2199
        %v2206 = vadd.f32 %v1979, %v2053
        %v2207 = vadd.f32 %v2206, %v2127
        %v2208 = vadd.f32 %v2207, %v2201
        %v2209 = vld [vmem:[%s4] sm:$0x3]
        %v2211 = vlaneseq
        %v2212 = vshrl.u32 %v2211, 7
        %v2213 = vsub.s32 0, %v2212
        %v2214 = vrot.slane %v2209, %v2213
        %v2215 = vlaneseq
        %v2216 = vshrl.u32 %v2215, 7
        %v2217 = vsub.s32 1, %v2216
        %v2218 = vrot.slane %v2209, %v2217
        %v2221 = vadd.f32 %v2205, %v2214
        %v2222 = vadd.f32 %v2208, %v2218
        %2223 = vst [vmem:[%s215] sm:$0xff] %v2221
        %2224 = vst [vmem:[%s215 + $0x8] sm:$0xff] %v2222
        %s2225 = sand.u32 %s137, 1
        %s2226 = scalar_lea.sflag [#allocation3], %s2225
        %s2227 = sand.u32 %s137, 1
        %s2228 = smul.addr %s2227, 16
        %s2229 = scalar_lea.vmem [#allocation2], %s2228
        // Predicated region
        $region41: #{tpu_custom_call.1} parent=39 // pred_check
          %p2230 = pneg %p147
        $region42: #{tpu_custom_call.1} parent=39 // pred_check_branch
          %2232 = sbr.rel (%p2230) target = $region44
        $region43: #{tpu_custom_call.1} parent=39 // pred_region
          %s2234 = ssub.s32 256, 256
          %2235 = vsyncadd %s2226, %s2234
          %s2236 = smul.addr %s19, 2
          %s2237 = smul.addr %s2236, 128
          %s2238 = scalar_lea.hbm %s5, %s2237
          %s2240 = sshll.u32 %s2229, 4
          %s2241 = int_to_ptr.vmem [resolvable:$true] %s2240
          %2243 = dma.vmem_to_hbm [thread:$0]  %s2241, 256, %s2238, %s2226
        $region44: #{tpu_custom_call.1} parent=39 // pred_fallthru
          _
      $region40: #{tpu_custom_call.1} parent=5 // pred_fallthru
        _
      %p2244 = scmp.le.s32.totalorder 2, %s14
      // Predicated region
      $region45: #{tpu_custom_call.1} parent=5 // pred_check
        %p2245 = pneg %p2244
      $region46: #{tpu_custom_call.1} parent=5 // pred_check_branch
        %2247 = sbr.rel (%p2245) target = $region48
      $region47: #{tpu_custom_call.1} parent=5 // pred_region
        %s2248 = ssub.s32 %s14, 2
        // Predicated region
        $region49: #{tpu_custom_call.1} parent=47 // pred_check
          %p2249 = pneg %p153
        $region50: #{tpu_custom_call.1} parent=47 // pred_check_branch
          %2251 = sbr.rel (%p2249) target = $region52
        $region51: #{tpu_custom_call.1} parent=47 // pred_region
          %s2252 = sand.u32 %s138, 1
          %s2253 = scalar_lea.sflag [#allocation3], %s2252
          %s2254 = sand.u32 %s138, 1
          %s2255 = smul.addr %s2254, 16
          %s2256 = scalar_lea.vmem [#allocation2], %s2255
          %2257 = dma.done %s2253, 256
        $region52: #{tpu_custom_call.1} parent=47 // pred_fallthru
          _
      $region48: #{tpu_custom_call.1} parent=5 // pred_fallthru
        _
    $region6: #{tpu_custom_call.1} parent=1 // loop_footer
      %s18 = sadd.s32 1, %s14
    $region7: #{tpu_custom_call.1} parent=1 // loop_footer_branch
      %13 = sbr.rel target = $region3
    $region8: #{tpu_custom_call.1} parent=1 // loop_exit
      _
    %2258 = vsyncpa [#allocation3], 1
    %s2259 = scalar_lea.sflag [#allocation3], 1
    %2260 = vsyncpa %s2259, 1

</llo_original>
